<compile_context>
chip_gen: v6e
topology: v6e:2x2x1
jax: 0.10.0
libtpu: 0.0.40
codegen_flags: <defaults>
</compile_context>

<pallas_src>
import functools

import jax
import jax.numpy as jnp
from jax.experimental import pallas as pl
from jax.experimental.pallas import tpu as pltpu

LN_EPS = 1e-5
BN_EPS = 1e-5
VMEM_LIMIT_BYTES = 32 * 1024 * 1024
DEFAULT_TM_MAX = 8192            # lane-axis tile cap (multiple of 128)


def _layernorm_cols(h, gamma, beta, eps=LN_EPS):
    """Two-pass LayerNorm over the feature axis (axis 0) of a (C, tm) block."""
    mu = jnp.mean(h, axis=0, keepdims=True)
    d = h - mu
    var = jnp.mean(d * d, axis=0, keepdims=True)
    return d * jax.lax.rsqrt(var + eps) * gamma + beta


def _mlp_cols(x, w1, w2, w3, vh, vd):
    """(Linear -> LayerNorm -> ReLU) x3 on a channels-first (D, tm) block, f32."""
    b1, g1, be1 = vh[:, 0:1], vh[:, 1:2], vh[:, 2:3]
    b2, g2, be2 = vh[:, 3:4], vh[:, 4:5], vh[:, 5:6]
    b3, g3, be3 = vd[:, 0:1], vd[:, 1:2], vd[:, 2:3]
    f32 = jnp.float32
    h = jnp.dot(w1, x, preferred_element_type=f32) + b1          # (Hh, tm)
    h = jnp.maximum(_layernorm_cols(h, g1, be1), 0.0)
    h = jnp.dot(w2, h, preferred_element_type=f32) + b2          # (Hh, tm)
    h = jnp.maximum(_layernorm_cols(h, g2, be2), 0.0)
    h = jnp.dot(w3, h, preferred_element_type=f32) + b3          # (D, tm)
    h = jnp.maximum(_layernorm_cols(h, g3, be3), 0.0)
    return h


def _stats_kernel(x_ref, w1_ref, w2_ref, w3_ref, vh_ref, vd_ref, stats_ref,
                  *, hw, tm, mask_tail):
    """Per-tile partial BatchNorm2d statistics of the MLP output (no HBM store
    of the activations).  Padded / out-of-bounds columns are masked out."""
    h = _mlp_cols(x_ref[...], w1_ref[...], w2_ref[...], w3_ref[...],
                  vh_ref[...], vd_ref[...])
    if mask_tail:
        col = (jax.lax.broadcasted_iota(jnp.int32, h.shape, 1)
               + pl.program_id(1) * tm)
        h = jnp.where(col < hw, h, 0.0)      # select: OOB garbage/NaN can't leak
    stats_ref[0] = jnp.sum(h, axis=1, keepdims=True)       # (D, 1) sum
    stats_ref[1] = jnp.sum(h * h, axis=1, keepdims=True)   # (D, 1) sum of squares


def _mlp_bn_relu_kernel(x_ref, w1_ref, w2_ref, w3_ref, vh_ref, vd_ref, ss_ref,
                        y_ref):
    """Recompute the tiny MLP and fuse BatchNorm (precomputed scale/shift) + ReLU.
    Output is written lane-dense in (B, D, H*W) blocks; OOB writes are discarded."""
    h = _mlp_cols(x_ref[...], w1_ref[...], w2_ref[...], w3_ref[...],
                  vh_ref[...], vd_ref[...])
    ss = ss_ref[...]                                        # (D, 2) = [scale, shift]
    y_ref[...] = jnp.maximum(h * ss[:, 0:1] + ss[:, 1:2], 0.0)


def _pick_tile(hw, batch, dims, hidden, tm_max):
    """Pick the lane-axis tile: as large as VMEM allows, >=2 tiles when B == 1."""
    tm_max = max(128, (int(tm_max) // 128) * 128)
    # Rough per-column footprint: double-buffered (D,tm) in + (D,tm) out
    # + a few live (Hh,tm) f32 intermediates.  Keep ~50% headroom of the limit.
    per_col = 4 * (4 * dims + 4 * dims + 4 * hidden)
    fit = max(128, ((VMEM_LIMIT_BYTES // 2) // per_col) // 128 * 128)
    cap = min(tm_max, fit)
    if hw <= cap:
        if batch == 1 and hw >= 256:
            return max(128, (hw // 2) // 128 * 128)   # >=2 tiles for v7x megacore
        return hw                                     # full-extent block (always legal)
    return cap                                        # multiple of 128


def fc_forward(x_nchw, params, *, tm_max=DEFAULT_TM_MAX):
    """Forward pass of FC. x_nchw: (B, D, H, W) float32 -> (B, D, H, W) float32."""
    B, D, H, W = x_nchw.shape
    Hh = 3 * D
    HW = H * W
    n_count = B * HW

    (w1, b1, g1, be1, w2, b2, g2, be2, w3, b3, g3, be3, bn_g, bn_b) = params

    # NCHW -> (B, D, H*W) is a free reshape; everything else stays in-kernel.
    x3 = x_nchw.reshape(B, D, HW)

    tm = _pick_tile(HW, B, D, Hh, tm_max)
    n_tiles = pl.cdiv(HW, tm)
    mask_tail = (n_tiles * tm != HW)

    # Pack the 12 tiny per-feature vectors into two operands.
    vh = jnp.stack([b1, g1, be1, b2, g2, be2], axis=1)      # (Hh, 6)
    vd = jnp.stack([b3, g3, be3], axis=1)                   # (D, 3)

    x_spec = pl.BlockSpec((None, D, tm), lambda b, i: (b, 0, i))
    full = lambda shape: pl.BlockSpec(shape, lambda b, i, _n=len(shape): (0,) * _n)
    w_specs = [full((Hh, D)), full((Hh, Hh)), full((D, Hh)),
               full((Hh, 6)), full((D, 3))]
    cparams = pltpu.CompilerParams(
        dimension_semantics=("parallel", "parallel"),
        vmem_limit_bytes=VMEM_LIMIT_BYTES)

    # ---- Pass 1: per-tile partial batch statistics (no activation writeback). --
    stats = pl.pallas_call(
        functools.partial(_stats_kernel, hw=HW, tm=tm, mask_tail=mask_tail),
        grid=(B, n_tiles),
        in_specs=[x_spec] + w_specs,
        out_specs=pl.BlockSpec((None, None, 2, D, 1),
                               lambda b, i: (b, i, 0, 0, 0)),
        out_shape=jax.ShapeDtypeStruct((B, n_tiles, 2, D, 1), jnp.float32),
        compiler_params=cparams,
    )(x3, w1, w2, w3, vh, vd)

    # Tiny per-channel glue: tree-reduce partials, finish training-mode BN
    # (biased variance), fold gamma/beta into a per-channel scale/shift.
    s = jnp.sum(stats, axis=(0, 1))                         # (2, D, 1)
    mean = s[0] / n_count                                   # (D, 1)
    var = jnp.maximum(s[1] / n_count - mean * mean, 0.0)    # (D, 1)
    scale = jax.lax.rsqrt(var + BN_EPS) * bn_g[:, None]     # (D, 1)
    shift = bn_b[:, None] - mean * scale                    # (D, 1)
    bn_ss = jnp.concatenate([scale, shift], axis=1)         # (D, 2)

    # ---- Pass 2: recompute MLP, fuse BN + ReLU, write (B, D, H*W) directly. ----
    y3 = pl.pallas_call(
        _mlp_bn_relu_kernel,
        grid=(B, n_tiles),
        in_specs=[x_spec] + w_specs + [full((D, 2))],
        out_specs=pl.BlockSpec((None, D, tm), lambda b, i: (b, 0, i)),
        out_shape=jax.ShapeDtypeStruct((B, D, HW), jnp.float32),
        compiler_params=cparams,
    )(x3, w1, w2, w3, vh, vd, bn_ss)

    # dropout=None -> Identity; activation=None -> ReLU (already fused above).
    return y3.reshape(B, D, H, W)


def init_params(key, dims):
    """Deterministic synthetic parameters matching FC(dims).__init__ shapes.
    Linear weights are (out, in) (PyTorch layout); per-feature vectors are 1-D."""
    Hh = 3 * dims
    ks = jax.random.split(key, 14)
    f32 = jnp.float32
    rnd = lambda k, shape, s: jax.random.normal(k, shape, f32) * s
    w1 = rnd(ks[0], (Hh, dims), 0.1); b1 = rnd(ks[1], (Hh,), 0.01)
    w2 = rnd(ks[2], (Hh, Hh), 0.1);   b2 = rnd(ks[3], (Hh,), 0.01)
    w3 = rnd(ks[4], (dims, Hh), 0.1); b3 = rnd(ks[5], (dims,), 0.01)
    g1 = 1.0 + rnd(ks[6], (Hh,), 0.1);   be1 = rnd(ks[7], (Hh,), 0.1)
    g2 = 1.0 + rnd(ks[8], (Hh,), 0.1);   be2 = rnd(ks[9], (Hh,), 0.1)
    g3 = 1.0 + rnd(ks[10], (dims,), 0.1); be3 = rnd(ks[11], (dims,), 0.1)
    bn_g = 1.0 + rnd(ks[12], (dims,), 0.1); bn_b = rnd(ks[13], (dims,), 0.1)
    return (w1, b1, g1, be1, w2, b2, g2, be2, w3, b3, g3, be3, bn_g, bn_b)


def fc_reference(x_nchw, params):
    """Pure-JAX f32 reference mirroring the PyTorch forward (training-mode BN)."""
    (w1, b1, g1, be1, w2, b2, g2, be2, w3, b3, g3, be3, bn_g, bn_b) = params
    hi = jax.lax.Precision.HIGHEST

    def ln(h, g, b):
        mu = jnp.mean(h, axis=-1, keepdims=True)
        var = jnp.mean((h - mu) ** 2, axis=-1, keepdims=True)
        return (h - mu) * jax.lax.rsqrt(var + LN_EPS) * g + b

    x = jnp.transpose(x_nchw, (0, 2, 3, 1))                           # NHWC
    h = jnp.maximum(ln(jnp.matmul(x, w1.T, precision=hi) + b1, g1, be1), 0.0)
    h = jnp.maximum(ln(jnp.matmul(h, w2.T, precision=hi) + b2, g2, be2), 0.0)
    h = jnp.maximum(ln(jnp.matmul(h, w3.T, precision=hi) + b3, g3, be3), 0.0)
    y = jnp.transpose(h, (0, 3, 1, 2))                                # NCHW
    mean = jnp.mean(y, axis=(0, 2, 3), keepdims=True)
    var = jnp.mean((y - mean) ** 2, axis=(0, 2, 3), keepdims=True)
    y = ((y - mean) * jax.lax.rsqrt(var + BN_EPS) * bn_g.reshape(1, -1, 1, 1)
         + bn_b.reshape(1, -1, 1, 1))
    return jnp.maximum(y, 0.0)


if __name__ == "__main__":
    key = jax.random.PRNGKey(0)
    kx1, kx2, kp = jax.random.split(key, 3)

    fwd = jax.jit(fc_forward, static_argnames=("tm_max",))

    # Case 1: B=2, D=4, 16x16 -> HW=256: one lane-dense (4, 256) tile per image;
    # the batch axis provides two "parallel" programs (v7x megacore-friendly).
    B, D, H, W = 2, 4, 16, 16
    x = jax.random.normal(kx1, (B, D, H, W), jnp.float32)
    params = init_params(kp, D)
    ref = fc_reference(x, params)
    out = jax.block_until_ready(fwd(x, params))
    assert out.shape == (B, D, H, W)
    err = jnp.abs(out - ref)
    # Reference matmuls use HIGHEST precision; kernel uses the Mosaic default
    # MXU path, so allow a modest tolerance.
    assert float(jnp.max(err)) < 5e-2 and float(jnp.mean(err)) < 5e-3, (
        f"case1 mismatch: max={float(jnp.max(err))} mean={float(jnp.mean(err))}")

    # Case 2: B=1 with ragged HW=300 -> tm=128, 3 tiles (>=2 tiles for v7x),
    # last tile partially out-of-bounds: exercises the in-kernel tail-column
    # masking of the BN statistics and the discarded OOB output writes.
    B2, D2, H2, W2 = 1, 4, 10, 30
    x2 = jax.random.normal(kx2, (B2, D2, H2, W2), jnp.float32)
    ref2 = fc_reference(x2, params)
    out2 = jax.block_until_ready(fwd(x2, params))
    assert out2.shape == (B2, D2, H2, W2)
    err2 = jnp.abs(out2 - ref2)
    assert float(jnp.max(err2)) < 5e-2 and float(jnp.mean(err2)) < 5e-3, (
        f"case2 mismatch: max={float(jnp.max(err2))} mean={float(jnp.mean(err2))}")

    print("KERNEL_OK")
</pallas_src>

<mosaic_0001>
module attributes {stable_mosaic.version = 11 : i64} {
  func.func @_stats_kernel(%arg0: i32, %arg1: i32, %arg2: memref<1x4x256xf32, #tpu.memory_space<vmem>>, %arg3: memref<12x4xf32, #tpu.memory_space<vmem>>, %arg4: memref<12x12xf32, #tpu.memory_space<vmem>>, %arg5: memref<4x12xf32, #tpu.memory_space<vmem>>, %arg6: memref<12x6xf32, #tpu.memory_space<vmem>>, %arg7: memref<4x3xf32, #tpu.memory_space<vmem>>, %arg8: memref<1x1x2x4x1xf32, #tpu.memory_space<vmem>>) attributes {dimension_semantics = [#tpu.dimension_semantics<parallel>, #tpu.dimension_semantics<parallel>], iteration_bounds = array<i64: 2, 1>, scalar_prefetch = 0 : i64, scratch_operands = 0 : i64, tpu.core_type = #tpu.core_type<tc>, window_params = [{transform_indices = @transform_0, window_bounds = array<i64: 1, 4, 256>}, {pipeline_mode = #tpu.pipeline_mode<synchronous>, transform_indices = @transform_1, window_bounds = array<i64: 12, 4>}, {pipeline_mode = #tpu.pipeline_mode<synchronous>, transform_indices = @transform_2, window_bounds = array<i64: 12, 12>}, {pipeline_mode = #tpu.pipeline_mode<synchronous>, transform_indices = @transform_3, window_bounds = array<i64: 4, 12>}, {pipeline_mode = #tpu.pipeline_mode<synchronous>, transform_indices = @transform_4, window_bounds = array<i64: 12, 6>}, {pipeline_mode = #tpu.pipeline_mode<synchronous>, transform_indices = @transform_5, window_bounds = array<i64: 4, 3>}, {transform_indices = @transform_6, window_bounds = array<i64: 1, 1, 2, 4, 1>}]} {
    %c0 = arith.constant 0 : index
    %c0_0 = arith.constant 0 : index
    %c0_1 = arith.constant 0 : index
    %0 = vector.load %arg2[%c0, %c0_0, %c0_1] : memref<1x4x256xf32, #tpu.memory_space<vmem>>, vector<1x4x256xf32>
    %1 = vector.shape_cast %0 : vector<1x4x256xf32> to vector<4x256xf32>
    %c0_2 = arith.constant 0 : index
    %c0_3 = arith.constant 0 : index
    %2 = vector.load %arg3[%c0_2, %c0_3] : memref<12x4xf32, #tpu.memory_space<vmem>>, vector<12x4xf32>
    %c0_4 = arith.constant 0 : index
    %c0_5 = arith.constant 0 : index
    %3 = vector.load %arg4[%c0_4, %c0_5] : memref<12x12xf32, #tpu.memory_space<vmem>>, vector<12x12xf32>
    %c0_6 = arith.constant 0 : index
    %c0_7 = arith.constant 0 : index
    %4 = vector.load %arg5[%c0_6, %c0_7] : memref<4x12xf32, #tpu.memory_space<vmem>>, vector<4x12xf32>
    %c0_8 = arith.constant 0 : index
    %c0_9 = arith.constant 0 : index
    %5 = vector.load %arg6[%c0_8, %c0_9] : memref<12x6xf32, #tpu.memory_space<vmem>>, vector<12x6xf32>
    %c0_10 = arith.constant 0 : index
    %c0_11 = arith.constant 0 : index
    %6 = vector.load %arg7[%c0_10, %c0_11] : memref<4x3xf32, #tpu.memory_space<vmem>>, vector<4x3xf32>
    %7 = vector.extract_strided_slice %5 {offsets = [0, 0], sizes = [12, 1], strides = [1, 1]} : vector<12x6xf32> to vector<12x1xf32>
    %8 = vector.extract_strided_slice %5 {offsets = [0, 1], sizes = [12, 1], strides = [1, 1]} : vector<12x6xf32> to vector<12x1xf32>
    %9 = vector.extract_strided_slice %5 {offsets = [0, 2], sizes = [12, 1], strides = [1, 1]} : vector<12x6xf32> to vector<12x1xf32>
    %10 = vector.extract_strided_slice %5 {offsets = [0, 3], sizes = [12, 1], strides = [1, 1]} : vector<12x6xf32> to vector<12x1xf32>
    %11 = vector.extract_strided_slice %5 {offsets = [0, 4], sizes = [12, 1], strides = [1, 1]} : vector<12x6xf32> to vector<12x1xf32>
    %12 = vector.extract_strided_slice %5 {offsets = [0, 5], sizes = [12, 1], strides = [1, 1]} : vector<12x6xf32> to vector<12x1xf32>
    %13 = vector.extract_strided_slice %6 {offsets = [0, 0], sizes = [4, 1], strides = [1, 1]} : vector<4x3xf32> to vector<4x1xf32>
    %14 = vector.extract_strided_slice %6 {offsets = [0, 1], sizes = [4, 1], strides = [1, 1]} : vector<4x3xf32> to vector<4x1xf32>
    %15 = vector.extract_strided_slice %6 {offsets = [0, 2], sizes = [4, 1], strides = [1, 1]} : vector<4x3xf32> to vector<4x1xf32>
    %cst = arith.constant dense<0.000000e+00> : vector<12x256xf32>
    %16 = tpu.matmul %2, %1, %cst {dimension_numbers = #tpu.dot_dimension_numbers<[1], [0], [0], [1], [0, 0, 1, 1], [], []>} : vector<12x4xf32>, vector<4x256xf32>, vector<12x256xf32> -> vector<12x256xf32>
    %17 = vector.broadcast %7 : vector<12x1xf32> to vector<12x256xf32>
    %18 = arith.addf %16, %17 : vector<12x256xf32>
    %cst_12 = arith.constant dense<0.000000e+00> : vector<256xf32>
    %19 = vector.multi_reduction <add>, %18, %cst_12 [0] : vector<12x256xf32> to vector<256xf32>
    %20 = vector.shape_cast %19 : vector<256xf32> to vector<1x256xf32>
    %cst_13 = arith.constant 1.200000e+01 : f32
    %21 = vector.broadcast %cst_13 : f32 to vector<1x256xf32>
    %22 = arith.divf %20, %21 : vector<1x256xf32>
    %23 = vector.broadcast %22 : vector<1x256xf32> to vector<12x256xf32>
    %24 = arith.subf %18, %23 : vector<12x256xf32>
    %25 = arith.mulf %24, %24 : vector<12x256xf32>
    %cst_14 = arith.constant dense<0.000000e+00> : vector<256xf32>
    %26 = vector.multi_reduction <add>, %25, %cst_14 [0] : vector<12x256xf32> to vector<256xf32>
    %27 = vector.shape_cast %26 : vector<256xf32> to vector<1x256xf32>
    %cst_15 = arith.constant 1.200000e+01 : f32
    %28 = vector.broadcast %cst_15 : f32 to vector<1x256xf32>
    %29 = arith.divf %27, %28 : vector<1x256xf32>
    %cst_16 = arith.constant 9.99999974E-6 : f32
    %30 = vector.broadcast %cst_16 : f32 to vector<1x256xf32>
    %31 = arith.addf %29, %30 : vector<1x256xf32>
    %32 = math.rsqrt %31 : vector<1x256xf32>
    %33 = vector.broadcast %32 : vector<1x256xf32> to vector<12x256xf32>
    %34 = arith.mulf %24, %33 : vector<12x256xf32>
    %35 = vector.broadcast %8 : vector<12x1xf32> to vector<12x256xf32>
    %36 = arith.mulf %34, %35 : vector<12x256xf32>
    %37 = vector.broadcast %9 : vector<12x1xf32> to vector<12x256xf32>
    %38 = arith.addf %36, %37 : vector<12x256xf32>
    %cst_17 = arith.constant 0.000000e+00 : f32
    %39 = vector.broadcast %cst_17 : f32 to vector<12x256xf32>
    %40 = arith.maximumf %38, %39 : vector<12x256xf32>
    %cst_18 = arith.constant dense<0.000000e+00> : vector<12x256xf32>
    %41 = tpu.matmul %3, %40, %cst_18 {dimension_numbers = #tpu.dot_dimension_numbers<[1], [0], [0], [1], [0, 0, 1, 1], [], []>} : vector<12x12xf32>, vector<12x256xf32>, vector<12x256xf32> -> vector<12x256xf32>
    %42 = vector.broadcast %10 : vector<12x1xf32> to vector<12x256xf32>
    %43 = arith.addf %41, %42 : vector<12x256xf32>
    %cst_19 = arith.constant dense<0.000000e+00> : vector<256xf32>
    %44 = vector.multi_reduction <add>, %43, %cst_19 [0] : vector<12x256xf32> to vector<256xf32>
    %45 = vector.shape_cast %44 : vector<256xf32> to vector<1x256xf32>
    %cst_20 = arith.constant 1.200000e+01 : f32
    %46 = vector.broadcast %cst_20 : f32 to vector<1x256xf32>
    %47 = arith.divf %45, %46 : vector<1x256xf32>
    %48 = vector.broadcast %47 : vector<1x256xf32> to vector<12x256xf32>
    %49 = arith.subf %43, %48 : vector<12x256xf32>
    %50 = arith.mulf %49, %49 : vector<12x256xf32>
    %cst_21 = arith.constant dense<0.000000e+00> : vector<256xf32>
    %51 = vector.multi_reduction <add>, %50, %cst_21 [0] : vector<12x256xf32> to vector<256xf32>
    %52 = vector.shape_cast %51 : vector<256xf32> to vector<1x256xf32>
    %cst_22 = arith.constant 1.200000e+01 : f32
    %53 = vector.broadcast %cst_22 : f32 to vector<1x256xf32>
    %54 = arith.divf %52, %53 : vector<1x256xf32>
    %cst_23 = arith.constant 9.99999974E-6 : f32
    %55 = vector.broadcast %cst_23 : f32 to vector<1x256xf32>
    %56 = arith.addf %54, %55 : vector<1x256xf32>
    %57 = math.rsqrt %56 : vector<1x256xf32>
    %58 = vector.broadcast %57 : vector<1x256xf32> to vector<12x256xf32>
    %59 = arith.mulf %49, %58 : vector<12x256xf32>
    %60 = vector.broadcast %11 : vector<12x1xf32> to vector<12x256xf32>
    %61 = arith.mulf %59, %60 : vector<12x256xf32>
    %62 = vector.broadcast %12 : vector<12x1xf32> to vector<12x256xf32>
    %63 = arith.addf %61, %62 : vector<12x256xf32>
    %cst_24 = arith.constant 0.000000e+00 : f32
    %64 = vector.broadcast %cst_24 : f32 to vector<12x256xf32>
    %65 = arith.maximumf %63, %64 : vector<12x256xf32>
    %cst_25 = arith.constant dense<0.000000e+00> : vector<4x256xf32>
    %66 = tpu.matmul %4, %65, %cst_25 {dimension_numbers = #tpu.dot_dimension_numbers<[1], [0], [0], [1], [0, 0, 1, 1], [], []>} : vector<4x12xf32>, vector<12x256xf32>, vector<4x256xf32> -> vector<4x256xf32>
    %67 = vector.broadcast %13 : vector<4x1xf32> to vector<4x256xf32>
    %68 = arith.addf %66, %67 : vector<4x256xf32>
    %cst_26 = arith.constant dense<0.000000e+00> : vector<256xf32>
    %69 = vector.multi_reduction <add>, %68, %cst_26 [0] : vector<4x256xf32> to vector<256xf32>
    %70 = vector.shape_cast %69 : vector<256xf32> to vector<1x256xf32>
    %cst_27 = arith.constant 4.000000e+00 : f32
    %71 = vector.broadcast %cst_27 : f32 to vector<1x256xf32>
    %72 = arith.divf %70, %71 : vector<1x256xf32>
    %73 = vector.broadcast %72 : vector<1x256xf32> to vector<4x256xf32>
    %74 = arith.subf %68, %73 : vector<4x256xf32>
    %75 = arith.mulf %74, %74 : vector<4x256xf32>
    %cst_28 = arith.constant dense<0.000000e+00> : vector<256xf32>
    %76 = vector.multi_reduction <add>, %75, %cst_28 [0] : vector<4x256xf32> to vector<256xf32>
    %77 = vector.shape_cast %76 : vector<256xf32> to vector<1x256xf32>
    %cst_29 = arith.constant 4.000000e+00 : f32
    %78 = vector.broadcast %cst_29 : f32 to vector<1x256xf32>
    %79 = arith.divf %77, %78 : vector<1x256xf32>
    %cst_30 = arith.constant 9.99999974E-6 : f32
    %80 = vector.broadcast %cst_30 : f32 to vector<1x256xf32>
    %81 = arith.addf %79, %80 : vector<1x256xf32>
    %82 = math.rsqrt %81 : vector<1x256xf32>
    %83 = vector.broadcast %82 : vector<1x256xf32> to vector<4x256xf32>
    %84 = arith.mulf %74, %83 : vector<4x256xf32>
    %85 = vector.broadcast %14 : vector<4x1xf32> to vector<4x256xf32>
    %86 = arith.mulf %84, %85 : vector<4x256xf32>
    %87 = vector.broadcast %15 : vector<4x1xf32> to vector<4x256xf32>
    %88 = arith.addf %86, %87 : vector<4x256xf32>
    %cst_31 = arith.constant 0.000000e+00 : f32
    %89 = vector.broadcast %cst_31 : f32 to vector<4x256xf32>
    %90 = arith.maximumf %88, %89 : vector<4x256xf32>
    %cst_32 = arith.constant dense<0.000000e+00> : vector<4xf32>
    %91 = vector.multi_reduction <add>, %90, %cst_32 [1] : vector<4x256xf32> to vector<4xf32>
    %92 = vector.shape_cast %91 : vector<4xf32> to vector<4x1xf32>
    %c0_33 = arith.constant 0 : index
    %c0_34 = arith.constant 0 : index
    %c0_35 = arith.constant 0 : index
    %c0_36 = arith.constant 0 : index
    %c0_37 = arith.constant 0 : index
    %93 = vector.load %arg8[%c0_33, %c0_34, %c0_35, %c0_36, %c0_37] : memref<1x1x2x4x1xf32, #tpu.memory_space<vmem>>, vector<1x1x1x4x1xf32>
    %94 = vector.shape_cast %93 : vector<1x1x1x4x1xf32> to vector<4x1xf32>
    %95 = vector.shape_cast %92 : vector<4x1xf32> to vector<1x1x1x4x1xf32>
    tpu.vector_store %arg8[%c0_33, %c0_34, %c0_35, %c0_36, %c0_37], %95 {strides = array<i32>} : memref<1x1x2x4x1xf32, #tpu.memory_space<vmem>>, vector<1x1x1x4x1xf32>,
    %96 = arith.mulf %90, %90 : vector<4x256xf32>
    %cst_38 = arith.constant dense<0.000000e+00> : vector<4xf32>
    %97 = vector.multi_reduction <add>, %96, %cst_38 [1] : vector<4x256xf32> to vector<4xf32>
    %98 = vector.shape_cast %97 : vector<4xf32> to vector<4x1xf32>
    %c0_39 = arith.constant 0 : index
    %c0_40 = arith.constant 0 : index
    %c1 = arith.constant 1 : index
    %c0_41 = arith.constant 0 : index
    %c0_42 = arith.constant 0 : index
    %99 = vector.load %arg8[%c0_39, %c0_40, %c1, %c0_41, %c0_42] : memref<1x1x2x4x1xf32, #tpu.memory_space<vmem>>, vector<1x1x1x4x1xf32>
    %100 = vector.shape_cast %99 : vector<1x1x1x4x1xf32> to vector<4x1xf32>
    %101 = vector.shape_cast %98 : vector<4x1xf32> to vector<1x1x1x4x1xf32>
    tpu.vector_store %arg8[%c0_39, %c0_40, %c1, %c0_41, %c0_42], %101 {strides = array<i32>} : memref<1x1x2x4x1xf32, #tpu.memory_space<vmem>>, vector<1x1x1x4x1xf32>,
    return
  }
  func.func @transform_0(%arg0: i32, %arg1: i32) -> (i32, i32, i32) {
    %c0_i32 = arith.constant 0 : i32
    %c0_i32_0 = arith.constant 0 : i32
    return %arg0, %c0_i32, %arg1 : i32, i32, i32
  }
  func.func @transform_1(%arg0: i32, %arg1: i32) -> (i32, i32) {
    %c0_i32 = arith.constant 0 : i32
    %c0_i32_0 = arith.constant 0 : i32
    %c0_i32_1 = arith.constant 0 : i32
    return %c0_i32, %c0_i32_0 : i32, i32
  }
  func.func @transform_2(%arg0: i32, %arg1: i32) -> (i32, i32) {
    %c0_i32 = arith.constant 0 : i32
    %c0_i32_0 = arith.constant 0 : i32
    %c0_i32_1 = arith.constant 0 : i32
    return %c0_i32, %c0_i32_0 : i32, i32
  }
  func.func @transform_3(%arg0: i32, %arg1: i32) -> (i32, i32) {
    %c0_i32 = arith.constant 0 : i32
    %c0_i32_0 = arith.constant 0 : i32
    %c0_i32_1 = arith.constant 0 : i32
    return %c0_i32, %c0_i32_0 : i32, i32
  }
  func.func @transform_4(%arg0: i32, %arg1: i32) -> (i32, i32) {
    %c0_i32 = arith.constant 0 : i32
    %c0_i32_0 = arith.constant 0 : i32
    %c0_i32_1 = arith.constant 0 : i32
    return %c0_i32, %c0_i32_0 : i32, i32
  }
  func.func @transform_5(%arg0: i32, %arg1: i32) -> (i32, i32) {
    %c0_i32 = arith.constant 0 : i32
    %c0_i32_0 = arith.constant 0 : i32
    %c0_i32_1 = arith.constant 0 : i32
    return %c0_i32, %c0_i32_0 : i32, i32
  }
  func.func @transform_6(%arg0: i32, %arg1: i32) -> (i32, i32, i32, i32, i32) {
    %c0_i32 = arith.constant 0 : i32
    %c0_i32_0 = arith.constant 0 : i32
    %c0_i32_1 = arith.constant 0 : i32
    %c0_i32_2 = arith.constant 0 : i32
    return %arg0, %arg1, %c0_i32, %c0_i32_0, %c0_i32_1 : i32, i32, i32, i32, i32
  }
}

module attributes {stable_mosaic.version = 11 : i64} {
  func.func @_mlp_bn_relu_kernel(%arg0: i32, %arg1: i32, %arg2: memref<1x4x256xf32, #tpu.memory_space<vmem>>, %arg3: memref<12x4xf32, #tpu.memory_space<vmem>>, %arg4: memref<12x12xf32, #tpu.memory_space<vmem>>, %arg5: memref<4x12xf32, #tpu.memory_space<vmem>>, %arg6: memref<12x6xf32, #tpu.memory_space<vmem>>, %arg7: memref<4x3xf32, #tpu.memory_space<vmem>>, %arg8: memref<4x2xf32, #tpu.memory_space<vmem>>, %arg9: memref<1x4x256xf32, #tpu.memory_space<vmem>>) attributes {dimension_semantics = [#tpu.dimension_semantics<parallel>, #tpu.dimension_semantics<parallel>], iteration_bounds = array<i64: 2, 1>, scalar_prefetch = 0 : i64, scratch_operands = 0 : i64, tpu.core_type = #tpu.core_type<tc>, window_params = [{transform_indices = @transform_0, window_bounds = array<i64: 1, 4, 256>}, {pipeline_mode = #tpu.pipeline_mode<synchronous>, transform_indices = @transform_1, window_bounds = array<i64: 12, 4>}, {pipeline_mode = #tpu.pipeline_mode<synchronous>, transform_indices = @transform_2, window_bounds = array<i64: 12, 12>}, {pipeline_mode = #tpu.pipeline_mode<synchronous>, transform_indices = @transform_3, window_bounds = array<i64: 4, 12>}, {pipeline_mode = #tpu.pipeline_mode<synchronous>, transform_indices = @transform_4, window_bounds = array<i64: 12, 6>}, {pipeline_mode = #tpu.pipeline_mode<synchronous>, transform_indices = @transform_5, window_bounds = array<i64: 4, 3>}, {pipeline_mode = #tpu.pipeline_mode<synchronous>, transform_indices = @transform_6, window_bounds = array<i64: 4, 2>}, {transform_indices = @transform_7, window_bounds = array<i64: 1, 4, 256>}]} {
    %c0 = arith.constant 0 : index
    %c0_0 = arith.constant 0 : index
    %c0_1 = arith.constant 0 : index
    %0 = vector.load %arg2[%c0, %c0_0, %c0_1] : memref<1x4x256xf32, #tpu.memory_space<vmem>>, vector<1x4x256xf32>
    %1 = vector.shape_cast %0 : vector<1x4x256xf32> to vector<4x256xf32>
    %c0_2 = arith.constant 0 : index
    %c0_3 = arith.constant 0 : index
    %2 = vector.load %arg3[%c0_2, %c0_3] : memref<12x4xf32, #tpu.memory_space<vmem>>, vector<12x4xf32>
    %c0_4 = arith.constant 0 : index
    %c0_5 = arith.constant 0 : index
    %3 = vector.load %arg4[%c0_4, %c0_5] : memref<12x12xf32, #tpu.memory_space<vmem>>, vector<12x12xf32>
    %c0_6 = arith.constant 0 : index
    %c0_7 = arith.constant 0 : index
    %4 = vector.load %arg5[%c0_6, %c0_7] : memref<4x12xf32, #tpu.memory_space<vmem>>, vector<4x12xf32>
    %c0_8 = arith.constant 0 : index
    %c0_9 = arith.constant 0 : index
    %5 = vector.load %arg6[%c0_8, %c0_9] : memref<12x6xf32, #tpu.memory_space<vmem>>, vector<12x6xf32>
    %c0_10 = arith.constant 0 : index
    %c0_11 = arith.constant 0 : index
    %6 = vector.load %arg7[%c0_10, %c0_11] : memref<4x3xf32, #tpu.memory_space<vmem>>, vector<4x3xf32>
    %7 = vector.extract_strided_slice %5 {offsets = [0, 0], sizes = [12, 1], strides = [1, 1]} : vector<12x6xf32> to vector<12x1xf32>
    %8 = vector.extract_strided_slice %5 {offsets = [0, 1], sizes = [12, 1], strides = [1, 1]} : vector<12x6xf32> to vector<12x1xf32>
    %9 = vector.extract_strided_slice %5 {offsets = [0, 2], sizes = [12, 1], strides = [1, 1]} : vector<12x6xf32> to vector<12x1xf32>
    %10 = vector.extract_strided_slice %5 {offsets = [0, 3], sizes = [12, 1], strides = [1, 1]} : vector<12x6xf32> to vector<12x1xf32>
    %11 = vector.extract_strided_slice %5 {offsets = [0, 4], sizes = [12, 1], strides = [1, 1]} : vector<12x6xf32> to vector<12x1xf32>
    %12 = vector.extract_strided_slice %5 {offsets = [0, 5], sizes = [12, 1], strides = [1, 1]} : vector<12x6xf32> to vector<12x1xf32>
    %13 = vector.extract_strided_slice %6 {offsets = [0, 0], sizes = [4, 1], strides = [1, 1]} : vector<4x3xf32> to vector<4x1xf32>
    %14 = vector.extract_strided_slice %6 {offsets = [0, 1], sizes = [4, 1], strides = [1, 1]} : vector<4x3xf32> to vector<4x1xf32>
    %15 = vector.extract_strided_slice %6 {offsets = [0, 2], sizes = [4, 1], strides = [1, 1]} : vector<4x3xf32> to vector<4x1xf32>
    %cst = arith.constant dense<0.000000e+00> : vector<12x256xf32>
    %16 = tpu.matmul %2, %1, %cst {dimension_numbers = #tpu.dot_dimension_numbers<[1], [0], [0], [1], [0, 0, 1, 1], [], []>} : vector<12x4xf32>, vector<4x256xf32>, vector<12x256xf32> -> vector<12x256xf32>
    %17 = vector.broadcast %7 : vector<12x1xf32> to vector<12x256xf32>
    %18 = arith.addf %16, %17 : vector<12x256xf32>
    %cst_12 = arith.constant dense<0.000000e+00> : vector<256xf32>
    %19 = vector.multi_reduction <add>, %18, %cst_12 [0] : vector<12x256xf32> to vector<256xf32>
    %20 = vector.shape_cast %19 : vector<256xf32> to vector<1x256xf32>
    %cst_13 = arith.constant 1.200000e+01 : f32
    %21 = vector.broadcast %cst_13 : f32 to vector<1x256xf32>
    %22 = arith.divf %20, %21 : vector<1x256xf32>
    %23 = vector.broadcast %22 : vector<1x256xf32> to vector<12x256xf32>
    %24 = arith.subf %18, %23 : vector<12x256xf32>
    %25 = arith.mulf %24, %24 : vector<12x256xf32>
    %cst_14 = arith.constant dense<0.000000e+00> : vector<256xf32>
    %26 = vector.multi_reduction <add>, %25, %cst_14 [0] : vector<12x256xf32> to vector<256xf32>
    %27 = vector.shape_cast %26 : vector<256xf32> to vector<1x256xf32>
    %cst_15 = arith.constant 1.200000e+01 : f32
    %28 = vector.broadcast %cst_15 : f32 to vector<1x256xf32>
    %29 = arith.divf %27, %28 : vector<1x256xf32>
    %cst_16 = arith.constant 9.99999974E-6 : f32
    %30 = vector.broadcast %cst_16 : f32 to vector<1x256xf32>
    %31 = arith.addf %29, %30 : vector<1x256xf32>
    %32 = math.rsqrt %31 : vector<1x256xf32>
    %33 = vector.broadcast %32 : vector<1x256xf32> to vector<12x256xf32>
    %34 = arith.mulf %24, %33 : vector<12x256xf32>
    %35 = vector.broadcast %8 : vector<12x1xf32> to vector<12x256xf32>
    %36 = arith.mulf %34, %35 : vector<12x256xf32>
    %37 = vector.broadcast %9 : vector<12x1xf32> to vector<12x256xf32>
    %38 = arith.addf %36, %37 : vector<12x256xf32>
    %cst_17 = arith.constant 0.000000e+00 : f32
    %39 = vector.broadcast %cst_17 : f32 to vector<12x256xf32>
    %40 = arith.maximumf %38, %39 : vector<12x256xf32>
    %cst_18 = arith.constant dense<0.000000e+00> : vector<12x256xf32>
    %41 = tpu.matmul %3, %40, %cst_18 {dimension_numbers = #tpu.dot_dimension_numbers<[1], [0], [0], [1], [0, 0, 1, 1], [], []>} : vector<12x12xf32>, vector<12x256xf32>, vector<12x256xf32> -> vector<12x256xf32>
    %42 = vector.broadcast %10 : vector<12x1xf32> to vector<12x256xf32>
    %43 = arith.addf %41, %42 : vector<12x256xf32>
    %cst_19 = arith.constant dense<0.000000e+00> : vector<256xf32>
    %44 = vector.multi_reduction <add>, %43, %cst_19 [0] : vector<12x256xf32> to vector<256xf32>
    %45 = vector.shape_cast %44 : vector<256xf32> to vector<1x256xf32>
    %cst_20 = arith.constant 1.200000e+01 : f32
    %46 = vector.broadcast %cst_20 : f32 to vector<1x256xf32>
    %47 = arith.divf %45, %46 : vector<1x256xf32>
    %48 = vector.broadcast %47 : vector<1x256xf32> to vector<12x256xf32>
    %49 = arith.subf %43, %48 : vector<12x256xf32>
    %50 = arith.mulf %49, %49 : vector<12x256xf32>
    %cst_21 = arith.constant dense<0.000000e+00> : vector<256xf32>
    %51 = vector.multi_reduction <add>, %50, %cst_21 [0] : vector<12x256xf32> to vector<256xf32>
    %52 = vector.shape_cast %51 : vector<256xf32> to vector<1x256xf32>
    %cst_22 = arith.constant 1.200000e+01 : f32
    %53 = vector.broadcast %cst_22 : f32 to vector<1x256xf32>
    %54 = arith.divf %52, %53 : vector<1x256xf32>
    %cst_23 = arith.constant 9.99999974E-6 : f32
    %55 = vector.broadcast %cst_23 : f32 to vector<1x256xf32>
    %56 = arith.addf %54, %55 : vector<1x256xf32>
    %57 = math.rsqrt %56 : vector<1x256xf32>
    %58 = vector.broadcast %57 : vector<1x256xf32> to vector<12x256xf32>
    %59 = arith.mulf %49, %58 : vector<12x256xf32>
    %60 = vector.broadcast %11 : vector<12x1xf32> to vector<12x256xf32>
    %61 = arith.mulf %59, %60 : vector<12x256xf32>
    %62 = vector.broadcast %12 : vector<12x1xf32> to vector<12x256xf32>
    %63 = arith.addf %61, %62 : vector<12x256xf32>
    %cst_24 = arith.constant 0.000000e+00 : f32
    %64 = vector.broadcast %cst_24 : f32 to vector<12x256xf32>
    %65 = arith.maximumf %63, %64 : vector<12x256xf32>
    %cst_25 = arith.constant dense<0.000000e+00> : vector<4x256xf32>
    %66 = tpu.matmul %4, %65, %cst_25 {dimension_numbers = #tpu.dot_dimension_numbers<[1], [0], [0], [1], [0, 0, 1, 1], [], []>} : vector<4x12xf32>, vector<12x256xf32>, vector<4x256xf32> -> vector<4x256xf32>
    %67 = vector.broadcast %13 : vector<4x1xf32> to vector<4x256xf32>
    %68 = arith.addf %66, %67 : vector<4x256xf32>
    %cst_26 = arith.constant dense<0.000000e+00> : vector<256xf32>
    %69 = vector.multi_reduction <add>, %68, %cst_26 [0] : vector<4x256xf32> to vector<256xf32>
    %70 = vector.shape_cast %69 : vector<256xf32> to vector<1x256xf32>
    %cst_27 = arith.constant 4.000000e+00 : f32
    %71 = vector.broadcast %cst_27 : f32 to vector<1x256xf32>
    %72 = arith.divf %70, %71 : vector<1x256xf32>
    %73 = vector.broadcast %72 : vector<1x256xf32> to vector<4x256xf32>
    %74 = arith.subf %68, %73 : vector<4x256xf32>
    %75 = arith.mulf %74, %74 : vector<4x256xf32>
    %cst_28 = arith.constant dense<0.000000e+00> : vector<256xf32>
    %76 = vector.multi_reduction <add>, %75, %cst_28 [0] : vector<4x256xf32> to vector<256xf32>
    %77 = vector.shape_cast %76 : vector<256xf32> to vector<1x256xf32>
    %cst_29 = arith.constant 4.000000e+00 : f32
    %78 = vector.broadcast %cst_29 : f32 to vector<1x256xf32>
    %79 = arith.divf %77, %78 : vector<1x256xf32>
    %cst_30 = arith.constant 9.99999974E-6 : f32
    %80 = vector.broadcast %cst_30 : f32 to vector<1x256xf32>
    %81 = arith.addf %79, %80 : vector<1x256xf32>
    %82 = math.rsqrt %81 : vector<1x256xf32>
    %83 = vector.broadcast %82 : vector<1x256xf32> to vector<4x256xf32>
    %84 = arith.mulf %74, %83 : vector<4x256xf32>
    %85 = vector.broadcast %14 : vector<4x1xf32> to vector<4x256xf32>
    %86 = arith.mulf %84, %85 : vector<4x256xf32>
    %87 = vector.broadcast %15 : vector<4x1xf32> to vector<4x256xf32>
    %88 = arith.addf %86, %87 : vector<4x256xf32>
    %cst_31 = arith.constant 0.000000e+00 : f32
    %89 = vector.broadcast %cst_31 : f32 to vector<4x256xf32>
    %90 = arith.maximumf %88, %89 : vector<4x256xf32>
    %c0_32 = arith.constant 0 : index
    %c0_33 = arith.constant 0 : index
    %91 = vector.load %arg8[%c0_32, %c0_33] : memref<4x2xf32, #tpu.memory_space<vmem>>, vector<4x2xf32>
    %92 = vector.extract_strided_slice %91 {offsets = [0, 0], sizes = [4, 1], strides = [1, 1]} : vector<4x2xf32> to vector<4x1xf32>
    %93 = vector.broadcast %92 : vector<4x1xf32> to vector<4x256xf32>
    %94 = arith.mulf %90, %93 : vector<4x256xf32>
    %95 = vector.extract_strided_slice %91 {offsets = [0, 1], sizes = [4, 1], strides = [1, 1]} : vector<4x2xf32> to vector<4x1xf32>
    %96 = vector.broadcast %95 : vector<4x1xf32> to vector<4x256xf32>
    %97 = arith.addf %94, %96 : vector<4x256xf32>
    %cst_34 = arith.constant 0.000000e+00 : f32
    %98 = vector.broadcast %cst_34 : f32 to vector<4x256xf32>
    %99 = arith.maximumf %97, %98 : vector<4x256xf32>
    %c0_35 = arith.constant 0 : index
    %c0_36 = arith.constant 0 : index
    %c0_37 = arith.constant 0 : index
    %100 = vector.load %arg9[%c0_35, %c0_36, %c0_37] : memref<1x4x256xf32, #tpu.memory_space<vmem>>, vector<1x4x256xf32>
    %101 = vector.shape_cast %100 : vector<1x4x256xf32> to vector<4x256xf32>
    %102 = vector.shape_cast %99 : vector<4x256xf32> to vector<1x4x256xf32>
    tpu.vector_store %arg9[%c0_35, %c0_36, %c0_37], %102 {strides = array<i32>} : memref<1x4x256xf32, #tpu.memory_space<vmem>>, vector<1x4x256xf32>,
    return
  }
  func.func @transform_0(%arg0: i32, %arg1: i32) -> (i32, i32, i32) {
    %c0_i32 = arith.constant 0 : i32
    %c0_i32_0 = arith.constant 0 : i32
    return %arg0, %c0_i32, %arg1 : i32, i32, i32
  }
  func.func @transform_1(%arg0: i32, %arg1: i32) -> (i32, i32) {
    %c0_i32 = arith.constant 0 : i32
    %c0_i32_0 = arith.constant 0 : i32
    %c0_i32_1 = arith.constant 0 : i32
    return %c0_i32, %c0_i32_0 : i32, i32
  }
  func.func @transform_2(%arg0: i32, %arg1: i32) -> (i32, i32) {
    %c0_i32 = arith.constant 0 : i32
    %c0_i32_0 = arith.constant 0 : i32
    %c0_i32_1 = arith.constant 0 : i32
    return %c0_i32, %c0_i32_0 : i32, i32
  }
  func.func @transform_3(%arg0: i32, %arg1: i32) -> (i32, i32) {
    %c0_i32 = arith.constant 0 : i32
    %c0_i32_0 = arith.constant 0 : i32
    %c0_i32_1 = arith.constant 0 : i32
    return %c0_i32, %c0_i32_0 : i32, i32
  }
  func.func @transform_4(%arg0: i32, %arg1: i32) -> (i32, i32) {
    %c0_i32 = arith.constant 0 : i32
    %c0_i32_0 = arith.constant 0 : i32
    %c0_i32_1 = arith.constant 0 : i32
    return %c0_i32, %c0_i32_0 : i32, i32
  }
  func.func @transform_5(%arg0: i32, %arg1: i32) -> (i32, i32) {
    %c0_i32 = arith.constant 0 : i32
    %c0_i32_0 = arith.constant 0 : i32
    %c0_i32_1 = arith.constant 0 : i32
    return %c0_i32, %c0_i32_0 : i32, i32
  }
  func.func @transform_6(%arg0: i32, %arg1: i32) -> (i32, i32) {
    %c0_i32 = arith.constant 0 : i32
    %c0_i32_0 = arith.constant 0 : i32
    %c0_i32_1 = arith.constant 0 : i32
    return %c0_i32, %c0_i32_0 : i32, i32
  }
  func.func @transform_7(%arg0: i32, %arg1: i32) -> (i32, i32, i32) {
    %c0_i32 = arith.constant 0 : i32
    %c0_i32_0 = arith.constant 0 : i32
    return %arg0, %c0_i32, %arg1 : i32, i32, i32
  }
}

</mosaic_0001>

<llo_original>
// kernel: fc_forward.3
$region0: #{fc_forward.3}
  #allocation0 [shape = 'u32[]', space=smem, size = 0x4, offset = 0x4, fixed_abs, tag = 'smem constant byte address 0x4 - core index']
  #allocation1 [shape = 'u32[144,128]{1,0:T(1,128)}', space=vmem, size = 0x12000, scoped, tag = 'internal scratch']
  %s0 = inlined_call_operand.vmem [shape: f32[2,4,256], index: 0, kind: input, shape index: {}]
  %s1 = inlined_call_operand.vmem [shape: f32[12,4], index: 1, kind: input, shape index: {}]
  %s2 = inlined_call_operand.vmem [shape: f32[12,12], index: 2, kind: input, shape index: {}]
  %s3 = inlined_call_operand.vmem [shape: f32[4,12], index: 3, kind: input, shape index: {}]
  %s4 = inlined_call_operand.vmem [shape: f32[12,6], index: 4, kind: input, shape index: {}]
  %s5 = inlined_call_operand.vmem [shape: f32[4,3], index: 5, kind: input, shape index: {}]
  %s6 = inlined_call_operand.vmem [shape: f32[4,2], index: 6, kind: input, shape index: {}]
  %s7 = inlined_call_operand.vmem [shape: f32[2,4,256], index: 7, kind: output, shape index: {}]
  %s8 = sld [smem:[#allocation0]]
  $region61: #{fc_forward.3} parent=0
    _
  %s10 = ssub.s32 1, %s8
  %s11 = scalar_select 0, %s10, %s8
  loop: start=0, step=1, limit=4
  $region2: #{fc_forward.3} parent=0 // loop_pre_header
    _
  $region3: #{fc_forward.3} parent=0 // loop_header
    %s13 = sphi 0, %s17
    %p14 = scmp.ge.s32.totalorder %s13, 4
    %s20 = sphi 0, %s32
    %s21 = sphi 0, %s28
    %s22 = sphi 0, %s20
    %s23 = sphi 0, %s21
    %s24 = sphi 0, %s22
    %s25 = sphi 0, %s23
    %s37 = sphi 0, %s39
    %s40 = sphi 0, %s37
    %s41 = sphi 0, %s40
    %s57 = sphi 0, %s41
    %s61 = sphi 0, %s61
    %s63 = sphi 0, %s61
    %s64 = sphi 0, %s63
    %s78 = sphi 0, %s64
    %s82 = sphi 0, %s82
    %s84 = sphi 0, %s82
    %s85 = sphi 0, %s84
    %s99 = sphi 0, %s85
    %s103 = sphi 0, %s103
    %s105 = sphi 0, %s103
    %s106 = sphi 0, %s105
    %s120 = sphi 0, %s106
    %s124 = sphi 0, %s124
    %s126 = sphi 0, %s124
    %s127 = sphi 0, %s126
    %s141 = sphi 0, %s127
    %s145 = sphi 0, %s145
    %s147 = sphi 0, %s145
    %s148 = sphi 0, %s147
    %s162 = sphi 0, %s148
    %s166 = sphi 0, %s166
    %s168 = sphi 0, %s166
    %s169 = sphi 0, %s168
    %s183 = sphi 0, %s169
    %s191 = sphi 0, %s193
    %s194 = sphi 0, %s191
    %s195 = sphi 0, %s194
    %s211 = sphi 0, %s195
  $region4: #{fc_forward.3} parent=0 // loop_header_branch
    %16 = sbr.rel (%p14) target = $region8
  $region5: #{fc_forward.3} parent=0 // loop_body
    %s18 = ssub.s32 %s13, 1
    %s19 = ssub.s32 %s13, 2
    %s26 = sadd.s32 1, %s21
    %p27 = scmp.ge.s32.totalorder %s26, 1
    %s28 = scalar_select %p27, 0, %s26
    %s29 = sadd.s32 1, %s20
    %s30 = scalar_select %p27, %s29, %s20
    %p31 = scmp.ge.s32.totalorder %s30, 2
    %s32 = scalar_select %p31, 0, %s30
    %s33 = ssub.s32 %s20, %s32
    %s34 = ssub.s32 %s21, %s28
    %s35 = sor.u32 %s33, %s34
    %p36 = scmp.eq.s32.totalorder %s35, 0
    %s38 = sadd.s32 %s37, 1
    %s39 = scalar_select %p36, %s37, %s38
    %p42 = pneg %p36
    %p43 = scmp.eq.s32.totalorder %s13, 1
    %p44 = por %p42, %p43
    %p45 = scmp.ne.s32.totalorder %s37, %s40
    %p46 = scmp.eq.s32.totalorder %s13, 0
    %p47 = por %p45, %p46
    %p48 = scmp.ne.s32.totalorder %s37, %s40
    %p49 = scmp.eq.s32.totalorder %s18, 1
    %p50 = por %p48, %p49
    %p51 = scmp.ne.s32.totalorder %s40, %s41
    %p52 = scmp.eq.s32.totalorder %s18, 0
    %p53 = por %p51, %p52
    %p54 = scmp.ne.s32.totalorder %s40, %s41
    %p55 = scmp.eq.s32.totalorder %s19, 1
    %p56 = por %p54, %p55
    %p58 = scmp.ne.s32.totalorder %s41, %s57
    %p59 = scmp.eq.s32.totalorder %s19, 0
    %p60 = por %p58, %p59
    %s62 = sadd.s32 %s61, 1
    %p65 = scmp.eq.s32.totalorder %s13, 1
    %p66 = scmp.ne.s32.totalorder %s61, %s63
    %p67 = scmp.eq.s32.totalorder %s13, 0
    %p68 = por %p66, %p67
    %p69 = scmp.ne.s32.totalorder %s61, %s63
    %p70 = scmp.eq.s32.totalorder %s18, 1
    %p71 = por %p69, %p70
    %p72 = scmp.ne.s32.totalorder %s63, %s64
    %p73 = scmp.eq.s32.totalorder %s18, 0
    %p74 = por %p72, %p73
    %p75 = scmp.ne.s32.totalorder %s63, %s64
    %p76 = scmp.eq.s32.totalorder %s19, 1
    %p77 = por %p75, %p76
    %p79 = scmp.ne.s32.totalorder %s64, %s78
    %p80 = scmp.eq.s32.totalorder %s19, 0
    %p81 = por %p79, %p80
    %s83 = sadd.s32 %s82, 1
    %p86 = scmp.eq.s32.totalorder %s13, 1
    %p87 = scmp.ne.s32.totalorder %s82, %s84
    %p88 = scmp.eq.s32.totalorder %s13, 0
    %p89 = por %p87, %p88
    %p90 = scmp.ne.s32.totalorder %s82, %s84
    %p91 = scmp.eq.s32.totalorder %s18, 1
    %p92 = por %p90, %p91
    %p93 = scmp.ne.s32.totalorder %s84, %s85
    %p94 = scmp.eq.s32.totalorder %s18, 0
    %p95 = por %p93, %p94
    %p96 = scmp.ne.s32.totalorder %s84, %s85
    %p97 = scmp.eq.s32.totalorder %s19, 1
    %p98 = por %p96, %p97
    %p100 = scmp.ne.s32.totalorder %s85, %s99
    %p101 = scmp.eq.s32.totalorder %s19, 0
    %p102 = por %p100, %p101
    %s104 = sadd.s32 %s103, 1
    %p107 = scmp.eq.s32.totalorder %s13, 1
    %p108 = scmp.ne.s32.totalorder %s103, %s105
    %p109 = scmp.eq.s32.totalorder %s13, 0
    %p110 = por %p108, %p109
    %p111 = scmp.ne.s32.totalorder %s103, %s105
    %p112 = scmp.eq.s32.totalorder %s18, 1
    %p113 = por %p111, %p112
    %p114 = scmp.ne.s32.totalorder %s105, %s106
    %p115 = scmp.eq.s32.totalorder %s18, 0
    %p116 = por %p114, %p115
    %p117 = scmp.ne.s32.totalorder %s105, %s106
    %p118 = scmp.eq.s32.totalorder %s19, 1
    %p119 = por %p117, %p118
    %p121 = scmp.ne.s32.totalorder %s106, %s120
    %p122 = scmp.eq.s32.totalorder %s19, 0
    %p123 = por %p121, %p122
    %s125 = sadd.s32 %s124, 1
    %p128 = scmp.eq.s32.totalorder %s13, 1
    %p129 = scmp.ne.s32.totalorder %s124, %s126
    %p130 = scmp.eq.s32.totalorder %s13, 0
    %p131 = por %p129, %p130
    %p132 = scmp.ne.s32.totalorder %s124, %s126
    %p133 = scmp.eq.s32.totalorder %s18, 1
    %p134 = por %p132, %p133
    %p135 = scmp.ne.s32.totalorder %s126, %s127
    %p136 = scmp.eq.s32.totalorder %s18, 0
    %p137 = por %p135, %p136
    %p138 = scmp.ne.s32.totalorder %s126, %s127
    %p139 = scmp.eq.s32.totalorder %s19, 1
    %p140 = por %p138, %p139
    %p142 = scmp.ne.s32.totalorder %s127, %s141
    %p143 = scmp.eq.s32.totalorder %s19, 0
    %p144 = por %p142, %p143
    %s146 = sadd.s32 %s145, 1
    %p149 = scmp.eq.s32.totalorder %s13, 1
    %p150 = scmp.ne.s32.totalorder %s145, %s147
    %p151 = scmp.eq.s32.totalorder %s13, 0
    %p152 = por %p150, %p151
    %p153 = scmp.ne.s32.totalorder %s145, %s147
    %p154 = scmp.eq.s32.totalorder %s18, 1
    %p155 = por %p153, %p154
    %p156 = scmp.ne.s32.totalorder %s147, %s148
    %p157 = scmp.eq.s32.totalorder %s18, 0
    %p158 = por %p156, %p157
    %p159 = scmp.ne.s32.totalorder %s147, %s148
    %p160 = scmp.eq.s32.totalorder %s19, 1
    %p161 = por %p159, %p160
    %p163 = scmp.ne.s32.totalorder %s148, %s162
    %p164 = scmp.eq.s32.totalorder %s19, 0
    %p165 = por %p163, %p164
    %s167 = sadd.s32 %s166, 1
    %p170 = scmp.eq.s32.totalorder %s13, 1
    %p171 = scmp.ne.s32.totalorder %s166, %s168
    %p172 = scmp.eq.s32.totalorder %s13, 0
    %p173 = por %p171, %p172
    %p174 = scmp.ne.s32.totalorder %s166, %s168
    %p175 = scmp.eq.s32.totalorder %s18, 1
    %p176 = por %p174, %p175
    %p177 = scmp.ne.s32.totalorder %s168, %s169
    %p178 = scmp.eq.s32.totalorder %s18, 0
    %p179 = por %p177, %p178
    %p180 = scmp.ne.s32.totalorder %s168, %s169
    %p181 = scmp.eq.s32.totalorder %s19, 1
    %p182 = por %p180, %p181
    %p184 = scmp.ne.s32.totalorder %s169, %s183
    %p185 = scmp.eq.s32.totalorder %s19, 0
    %p186 = por %p184, %p185
    %s187 = ssub.s32 %s20, %s32
    %s188 = ssub.s32 %s21, %s28
    %s189 = sor.u32 %s187, %s188
    %p190 = scmp.eq.s32.totalorder %s189, 0
    %s192 = sadd.s32 %s191, 1
    %s193 = scalar_select %p190, %s191, %s192
    %p196 = pneg %p190
    %p197 = scmp.eq.s32.totalorder %s13, 1
    %p198 = por %p196, %p197
    %p199 = scmp.ne.s32.totalorder %s191, %s194
    %p200 = scmp.eq.s32.totalorder %s13, 0
    %p201 = por %p199, %p200
    %p202 = scmp.ne.s32.totalorder %s191, %s194
    %p203 = scmp.eq.s32.totalorder %s18, 1
    %p204 = por %p202, %p203
    %p205 = scmp.ne.s32.totalorder %s194, %s195
    %p206 = scmp.eq.s32.totalorder %s18, 0
    %p207 = por %p205, %p206
    %p208 = scmp.ne.s32.totalorder %s194, %s195
    %p209 = scmp.eq.s32.totalorder %s19, 1
    %p210 = por %p208, %p209
    %p212 = scmp.ne.s32.totalorder %s195, %s211
    %p213 = scmp.eq.s32.totalorder %s19, 0
    %p214 = por %p212, %p213
    %p215 = scmp.le.s32.totalorder 1, %s13
    %p216 = scmp.lt.s32.totalorder %s13, 3
    %p217 = pnand %p215, %p216
    %p218 = pneg %p217
    // Predicated region
    $region9: #{fc_forward.3} parent=5 // pred_check
      _
    $region10: #{fc_forward.3} parent=5 // pred_check_branch
      %220 = sbr.rel (%p217) target = $region12
    $region11: #{fc_forward.3} parent=5 // pred_region
      %s221 = ssub.s32 %s13, 1
      // Predicated region
      $region13: #{fc_forward.3} parent=11 // pred_check
        %p222 = pneg %p74
      $region14: #{fc_forward.3} parent=11 // pred_check_branch
        %224 = sbr.rel (%p222) target = $region16
      $region15: #{fc_forward.3} parent=11 // pred_region
        _
      $region16: #{fc_forward.3} parent=11 // pred_fallthru
        _
      // Predicated region
      $region17: #{fc_forward.3} parent=11 // pred_check
        %p225 = pneg %p95
      $region18: #{fc_forward.3} parent=11 // pred_check_branch
        %227 = sbr.rel (%p225) target = $region20
      $region19: #{fc_forward.3} parent=11 // pred_region
        _
      $region20: #{fc_forward.3} parent=11 // pred_fallthru
        _
      // Predicated region
      $region21: #{fc_forward.3} parent=11 // pred_check
        %p228 = pneg %p116
      $region22: #{fc_forward.3} parent=11 // pred_check_branch
        %230 = sbr.rel (%p228) target = $region24
      $region23: #{fc_forward.3} parent=11 // pred_region
        _
      $region24: #{fc_forward.3} parent=11 // pred_fallthru
        _
      // Predicated region
      $region25: #{fc_forward.3} parent=11 // pred_check
        %p231 = pneg %p137
      $region26: #{fc_forward.3} parent=11 // pred_check_branch
        %233 = sbr.rel (%p231) target = $region28
      $region27: #{fc_forward.3} parent=11 // pred_region
        _
      $region28: #{fc_forward.3} parent=11 // pred_fallthru
        _
      // Predicated region
      $region29: #{fc_forward.3} parent=11 // pred_check
        %p234 = pneg %p158
      $region30: #{fc_forward.3} parent=11 // pred_check_branch
        %236 = sbr.rel (%p234) target = $region32
      $region31: #{fc_forward.3} parent=11 // pred_region
        _
      $region32: #{fc_forward.3} parent=11 // pred_fallthru
        _
      // Predicated region
      $region33: #{fc_forward.3} parent=11 // pred_check
        %p237 = pneg %p179
      $region34: #{fc_forward.3} parent=11 // pred_check_branch
        %239 = sbr.rel (%p237) target = $region36
      $region35: #{fc_forward.3} parent=11 // pred_region
        _
      $region36: #{fc_forward.3} parent=11 // pred_fallthru
        _
    $region12: #{fc_forward.3} parent=5 // pred_fallthru
      _
    %p240 = scmp.lt.s32.totalorder %s13, 2
    // Predicated region
    $region37: #{fc_forward.3} parent=5 // pred_check
      %p241 = pneg %p240
    $region38: #{fc_forward.3} parent=5 // pred_check_branch
      %243 = sbr.rel (%p241) target = $region40
    $region39: #{fc_forward.3} parent=5 // pred_region
      // Predicated region
      $region41: #{fc_forward.3} parent=39 // pred_check
        %p244 = pneg %p47
      $region42: #{fc_forward.3} parent=39 // pred_check_branch
        %246 = sbr.rel (%p244) target = $region44
      $region43: #{fc_forward.3} parent=39 // pred_region
        %s247 = smul.u32 2, %s21
        %p248 = scmp.lt.s32.totalorder %s20, 1
        %s249 = scalar_select %p248, %s20, 1
        %p250 = scmp.lt.s32.totalorder %s247, 1
        %s251 = scalar_select %p250, %s247, 1
        %s252 = smul.addr %s249, 2
        %s253 = sadd.s32 %s251, %s252
        %s254 = smul.addr %s253, 4
        %s255 = scalar_lea.vmem %s0, %s254
        %s256 = smul.u32 2, %s21
      $region44: #{fc_forward.3} parent=39 // pred_fallthru
        _
    $region40: #{fc_forward.3} parent=5 // pred_fallthru
      _
    %p257 = scmp.le.s32.totalorder 1, %s13
    %p258 = scmp.lt.s32.totalorder %s13, 3
    %p259 = pnand %p257, %p258
    %p260 = pneg %p259
    // Predicated region
    $region45: #{fc_forward.3} parent=5 // pred_check
      _
    $region46: #{fc_forward.3} parent=5 // pred_check_branch
      %262 = sbr.rel (%p259) target = $region48
    $region47: #{fc_forward.3} parent=5 // pred_region
      %s263 = ssub.s32 %s13, 1
      %s264 = smul.u32 2, %s23
      %p265 = scmp.lt.s32.totalorder %s22, 1
      %s266 = scalar_select %p265, %s22, 1
      %p267 = scmp.lt.s32.totalorder %s264, 1
      %s268 = scalar_select %p267, %s264, 1
      %s269 = smul.addr %s266, 2
      %s270 = sadd.s32 %s268, %s269
      %s271 = smul.addr %s270, 4
      %s272 = scalar_lea.vmem %s0, %s271
      %p273 = pneg %p53
      %p274 = pneg %p50
      %p275 = pneg %p74
      %p276 = pneg %p71
      %p277 = pneg %p95
      %p278 = pneg %p92
      %p279 = pneg %p116
      %p280 = pneg %p113
      %p281 = pneg %p137
      %p282 = pneg %p134
      %p283 = pneg %p158
      %p284 = pneg %p155
      %p285 = pneg %p179
      %p286 = pneg %p176
      %p287 = pneg %p207
      %p288 = pneg %p204
      %s289 = smul.u32 2, %s23
      %p290 = scmp.lt.s32.totalorder %s22, 1
      %s291 = scalar_select %p290, %s22, 1
      %p292 = scmp.lt.s32.totalorder %s289, 1
      %s293 = scalar_select %p292, %s289, 1
      %s294 = smul.addr %s291, 2
      %s295 = sadd.s32 %s293, %s294
      %s296 = smul.addr %s295, 4
      %s297 = scalar_lea.vmem %s7, %s296
      %s298 = smul.u32 2, %s23
      %p299 = scmp.lt.s32.totalorder %s22, 1
      %s300 = scalar_select %p299, %s22, 1
      %p301 = scmp.lt.s32.totalorder %s298, 1
      %s302 = scalar_select %p301, %s298, 1
      %s303 = smul.addr %s300, 2
      %s304 = sadd.s32 %s302, %s303
      %s305 = smul.addr %s304, 4
      %s306 = scalar_lea.vmem %s0, %s305
      %s307 = smul.u32 2, %s23
      %s308 = smul.u32 2, %s23
      %p309 = scmp.lt.s32.totalorder %s22, 1
      %s310 = scalar_select %p309, %s22, 1
      %p311 = scmp.lt.s32.totalorder %s308, 1
      %s312 = scalar_select %p311, %s308, 1
      %s313 = smul.addr %s310, 2
      %s314 = sadd.s32 %s312, %s313
      %s315 = smul.addr %s314, 4
      %s316 = scalar_lea.vmem %s7, %s315
      %s317 = smul.u32 2, %s23
      %v318 = vld [vmem:[%s306] sm:$0xff]
      %v319 = vld [vmem:[%s1] sm:$0xff]
      %v320 = vld [vmem:[%s1 + $0x8] sm:$0xf]
      %v321 = vld [vmem:[%s2] sm:$0xff]
      %v322 = vld [vmem:[%s2 + $0x8] sm:$0xf]
      %v323 = vld [vmem:[%s3] sm:$0xf]
      %v324 = vld [vmem:[%s4] sm:$0xff]
      %v325 = vld [vmem:[%s4 + $0x8] sm:$0xf]
      %v326 = vld [vmem:[%s5] sm:$0xf]
      %328 = vset.pattern.permute.xlu0 0
      %329 = vperm.xlu0 %328, %v324
      %v330 = vpop.permute.xlu0 %329
      %333 = vset.pattern.permute.xlu0 0
      %334 = vperm.xlu0 %333, %v325
      %v335 = vpop.permute.xlu0 %334
      %v338 = vcombine.high %v318, %v318
      %vm339 = vcmask 31744
      %v341 = vsel %vm339, %v319, 0
      %v344 = vsel %vm339, %v320, 0
      %vm346 = vcmask 1043456
      %v347 = vsel %vm346, %v318, 0
      %v349 = vsel %vm346, %v338, 0
      %351 = vmatprep.subr.mxu0 0.0
      %352 = vmatpush1.msra.mxu0 0.0
      %353 = vmatprep.subr.mxu0 0.0
      %354 = vmatpush1.msra.mxu0 0.0
      %355 = vmatprep.subr.mxu0 0.0
      %356 = vmatpush1.msra.mxu0 0.0
      %357 = vmatprep.subr.mxu0 0.0
      %358 = vmatpush1.msra.mxu0 0.0
      %359 = vmatprep.subr.mxu0 0.0
      %360 = vmatpush1.msra.mxu0 0.0
      %361 = vmatprep.subr.mxu0 0.0
      %362 = vmatpush1.msra.mxu0 0.0
      %363 = vmatprep.subr.mxu0 0.0
      %364 = vmatpush1.msra.mxu0 0.0
      %365 = vmatprep.subr.mxu0 0.0
      %366 = vmatpush1.msra.mxu0 0.0
      %367 = vmatprep.subr.mxu0 0.0
      %368 = vmatpush1.msra.mxu0 0.0
      %369 = vmatprep.subr.mxu0 0.0
      %370 = vmatpush1.msra.mxu0 0.0
      %371 = vmatprep.subr.mxu0 0.0
      %372 = vmatpush1.msra.mxu0 0.0
      %373 = vmatprep.subr.mxu0 0.0
      %374 = vmatpush1.msra.mxu0 0.0
      %375 = vmatprep.subr.mxu0 0.0
      %376 = vmatpush1.msra.mxu0 0.0
      %377 = vmatprep.subr.mxu0 0.0
      %378 = vmatpush1.msra.mxu0 0.0
      %379 = vmatprep.subr.mxu0 0.0
      %380 = vmatpush1.msra.mxu0 0.0
      %381 = vmatprep.subr.mxu0 %v349
      %382 = vmatpush1.msra.mxu0 %v347
      %383 = vmatprep.subr.mxu0 0.0
      %384 = vmatpush2.msra.mxu0 0.0
      %385 = vmatprep.subr.mxu0 0.0
      %386 = vmatpush2.msra.mxu0 0.0
      %387 = vmatprep.subr.mxu0 0.0
      %388 = vmatpush2.msra.mxu0 0.0
      %389 = vmatprep.subr.mxu0 0.0
      %390 = vmatpush2.msra.mxu0 0.0
      %391 = vmatprep.subr.mxu0 0.0
      %392 = vmatpush2.msra.mxu0 0.0
      %393 = vmatprep.subr.mxu0 0.0
      %394 = vmatpush2.msra.mxu0 0.0
      %395 = vmatprep.subr.mxu0 0.0
      %396 = vmatpush2.msra.mxu0 0.0
      %397 = vmatprep.subr.mxu0 0.0
      %398 = vmatpush2.msra.mxu0 0.0
      %399 = vmatprep.subr.mxu0 0.0
      %400 = vmatpush2.msra.mxu0 0.0
      %401 = vmatprep.subr.mxu0 0.0
      %402 = vmatpush2.msra.mxu0 0.0
      %403 = vmatprep.subr.mxu0 0.0
      %404 = vmatpush2.msra.mxu0 0.0
      %405 = vmatprep.subr.mxu0 0.0
      %406 = vmatpush2.msra.mxu0 0.0
      %407 = vmatprep.subr.mxu0 0.0
      %408 = vmatpush2.msra.mxu0 0.0
      %409 = vmatprep.subr.mxu0 0.0
      %410 = vmatpush2.msra.mxu0 0.0
      %411 = vmatprep.subr.mxu0 0.0
      %412 = vmatpush2.msra.mxu0 0.0
      %413 = vmatprep.subr.mxu0 0.0
      %414 = vmatpush2.msra.mxu0 0.0
      %415 = vmatprep.mubr.f32.mxu0 0.0
      %416 = vmatmul.mubr.f32.gmra.mxu0 %v341
      %v417 = vpop.f32.mrf.mxu0
      %v418 = vadd.f32 %v330, %v417
      %v419 = vpop.f32.mrf.mxu0
      %v420 = vadd.f32 %v330, %v419
      %421 = vmatprep.mubr.f32.mxu0 0.0
      %422 = vmatmul.mubr.f32.gmra.mxu0 %v344
      %v423 = vpop.f32.mrf.mxu0
      %v424 = vadd.f32 %v335, %v423
      %v425 = vpop.f32.mrf.mxu0
      %v426 = vadd.f32 %v335, %v425
      %427 = vdwg.mxu0
      %v428 = vsel %vm346, %v424, 0.0
      %v429 = vadd.f32 %v418, %v428
      %v430 = vrot.slane %v429, 4
      %v431 = vadd.f32 %v429, %v430
      %v432 = vrot.slane %v431, 2
      %v433 = vadd.f32 %v431, %v432
      %v434 = vrot.slane %v433, 1
      %v435 = vadd.f32 %v433, %v434
      %v436 = vsel %vm346, %v426, 0.0
      %v437 = vadd.f32 %v420, %v436
      %v438 = vrot.slane %v437, 4
      %v439 = vadd.f32 %v437, %v438
      %v440 = vrot.slane %v439, 2
      %v441 = vadd.f32 %v439, %v440
      %v442 = vrot.slane %v441, 1
      %v443 = vadd.f32 %v441, %v442
      %v444 = vrcp.pop 12.0
      %v445 = vmul.f32 %v435, %v444
      %v446 = vmul.f32 %v443, %v444
      %v447 = vsub.f32 %v418, %v445
      %v448 = vsub.f32 %v420, %v446
      %v449 = vsub.f32 %v424, %v445
      %v450 = vsub.f32 %v426, %v446
      %v451 = vmul.f32 %v447, %v447
      %v452 = vmul.f32 %v448, %v448
      %v453 = vmul.f32 %v449, %v449
      %v454 = vmul.f32 %v450, %v450
      %v455 = vsel %vm346, %v453, 0.0
      %v456 = vadd.f32 %v451, %v455
      %v457 = vrot.slane %v456, 4
      %v458 = vadd.f32 %v456, %v457
      %v459 = vrot.slane %v458, 2
      %v460 = vadd.f32 %v458, %v459
      %v461 = vrot.slane %v460, 1
      %v462 = vadd.f32 %v460, %v461
      %v463 = vsel %vm346, %v454, 0.0
      %v464 = vadd.f32 %v452, %v463
      %v465 = vrot.slane %v464, 4
      %v466 = vadd.f32 %v464, %v465
      %v467 = vrot.slane %v466, 2
      %v468 = vadd.f32 %v466, %v467
      %v469 = vrot.slane %v468, 1
      %v470 = vadd.f32 %v468, %v469
      %v471 = vmul.f32 %v462, %v444
      %v472 = vmul.f32 %v470, %v444
      %v473 = vadd.f32 %v471, 1e-05
      %v474 = vadd.f32 %v472, 1e-05
      %v475 = vrsqrt.pop %v473
      %v476 = vrsqrt.pop %v474
      %v477 = vmul.f32 %v447, %v475
      %v478 = vmul.f32 %v448, %v476
      %v479 = vmul.f32 %v449, %v475
      %v480 = vmul.f32 %v450, %v476
      %481 = vset.pattern.permute.xlu0 1
      %482 = vperm.xlu0 %481, %v324
      %v483 = vpop.permute.xlu0 %482
      %485 = vset.pattern.permute.xlu0 1
      %486 = vperm.xlu0 %485, %v325
      %v487 = vpop.permute.xlu0 %486
      %v489 = vmul.f32 %v477, %v483
      %v490 = vmul.f32 %v478, %v483
      %v491 = vmul.f32 %v479, %v487
      %v492 = vmul.f32 %v480, %v487
      %493 = vset.pattern.permute.xlu0 2
      %494 = vperm.xlu0 %493, %v324
      %v495 = vpop.permute.xlu0 %494
      %497 = vset.pattern.permute.xlu0 2
      %498 = vperm.xlu0 %497, %v325
      %v499 = vpop.permute.xlu0 %498
      %v501 = vadd.f32 %v489, %v495
      %v502 = vadd.f32 %v490, %v495
      %v503 = vadd.f32 %v491, %v499
      %v504 = vadd.f32 %v492, %v499
      %v505 = vmax.f32 %v501, 0.0
      %v506 = vmax.f32 %v502, 0.0
      %v507 = vmax.f32 %v503, 0.0
      %v508 = vmax.f32 %v504, 0.0
      %509 = vset.pattern.permute.xlu0 3
      %510 = vperm.xlu0 %509, %v324
      %v511 = vpop.permute.xlu0 %510
      %513 = vset.pattern.permute.xlu0 3
      %514 = vperm.xlu0 %513, %v325
      %v515 = vpop.permute.xlu0 %514
      %vm517 = vcmask 97280
      %v519 = vsel %vm517, %v321, 0
      %v522 = vsel %vm517, %v322, 0
      %v525 = vsel %vm346, %v507, 0
      %v528 = vsel %vm346, %v508, 0
      %530 = vmatprep.subr.mxu0 0.0
      %531 = vmatpush1.msra.mxu0 0.0
      %532 = vmatprep.subr.mxu0 0.0
      %533 = vmatpush1.msra.mxu0 0.0
      %534 = vmatprep.subr.mxu0 0.0
      %535 = vmatpush1.msra.mxu0 0.0
      %536 = vmatprep.subr.mxu0 0.0
      %537 = vmatpush1.msra.mxu0 0.0
      %538 = vmatprep.subr.mxu0 0.0
      %539 = vmatpush1.msra.mxu0 0.0
      %540 = vmatprep.subr.mxu0 0.0
      %541 = vmatpush1.msra.mxu0 0.0
      %542 = vmatprep.subr.mxu0 0.0
      %543 = vmatpush1.msra.mxu0 0.0
      %544 = vmatprep.subr.mxu0 0.0
      %545 = vmatpush1.msra.mxu0 0.0
      %546 = vmatprep.subr.mxu0 0.0
      %547 = vmatpush1.msra.mxu0 0.0
      %548 = vmatprep.subr.mxu0 0.0
      %549 = vmatpush1.msra.mxu0 0.0
      %550 = vmatprep.subr.mxu0 0.0
      %551 = vmatpush1.msra.mxu0 0.0
      %552 = vmatprep.subr.mxu0 0.0
      %553 = vmatpush1.msra.mxu0 0.0
      %554 = vmatprep.subr.mxu0 0.0
      %555 = vmatpush1.msra.mxu0 0.0
      %556 = vmatprep.subr.mxu0 0.0
      %557 = vmatpush1.msra.mxu0 0.0
      %558 = vmatprep.subr.mxu0 %v528
      %559 = vmatpush1.msra.mxu0 %v525
      %560 = vmatprep.subr.mxu0 %v506
      %561 = vmatpush1.msra.mxu0 %v505
      %562 = vmatprep.subr.mxu0 0.0
      %563 = vmatpush2.msra.mxu0 0.0
      %564 = vmatprep.subr.mxu0 0.0
      %565 = vmatpush2.msra.mxu0 0.0
      %566 = vmatprep.subr.mxu0 0.0
      %567 = vmatpush2.msra.mxu0 0.0
      %568 = vmatprep.subr.mxu0 0.0
      %569 = vmatpush2.msra.mxu0 0.0
      %570 = vmatprep.subr.mxu0 0.0
      %571 = vmatpush2.msra.mxu0 0.0
      %572 = vmatprep.subr.mxu0 0.0
      %573 = vmatpush2.msra.mxu0 0.0
      %574 = vmatprep.subr.mxu0 0.0
      %575 = vmatpush2.msra.mxu0 0.0
      %576 = vmatprep.subr.mxu0 0.0
      %577 = vmatpush2.msra.mxu0 0.0
      %578 = vmatprep.subr.mxu0 0.0
      %579 = vmatpush2.msra.mxu0 0.0
      %580 = vmatprep.subr.mxu0 0.0
      %581 = vmatpush2.msra.mxu0 0.0
      %582 = vmatprep.subr.mxu0 0.0
      %583 = vmatpush2.msra.mxu0 0.0
      %584 = vmatprep.subr.mxu0 0.0
      %585 = vmatpush2.msra.mxu0 0.0
      %586 = vmatprep.subr.mxu0 0.0
      %587 = vmatpush2.msra.mxu0 0.0
      %588 = vmatprep.subr.mxu0 0.0
      %589 = vmatpush2.msra.mxu0 0.0
      %590 = vmatprep.subr.mxu0 0.0
      %591 = vmatpush2.msra.mxu0 0.0
      %592 = vmatprep.subr.mxu0 0.0
      %593 = vmatpush2.msra.mxu0 0.0
      %594 = vmatprep.mubr.f32.mxu0 0.0
      %595 = vmatmul.mubr.f32.gmra.mxu0 %v519
      %v596 = vpop.f32.mrf.mxu0
      %v597 = vadd.f32 %v511, %v596
      %v598 = vpop.f32.mrf.mxu0
      %v599 = vadd.f32 %v511, %v598
      %600 = vmatprep.mubr.f32.mxu0 0.0
      %601 = vmatmul.mubr.f32.gmra.mxu0 %v522
      %v602 = vpop.f32.mrf.mxu0
      %v603 = vadd.f32 %v515, %v602
      %v604 = vpop.f32.mrf.mxu0
      %v605 = vadd.f32 %v515, %v604
      %606 = vdwg.mxu0
      %v607 = vsel %vm346, %v603, 0.0
      %v608 = vadd.f32 %v597, %v607
      %v609 = vrot.slane %v608, 4
      %v610 = vadd.f32 %v608, %v609
      %v611 = vrot.slane %v610, 2
      %v612 = vadd.f32 %v610, %v611
      %v613 = vrot.slane %v612, 1
      %v614 = vadd.f32 %v612, %v613
      %v615 = vsel %vm346, %v605, 0.0
      %v616 = vadd.f32 %v599, %v615
      %v617 = vrot.slane %v616, 4
      %v618 = vadd.f32 %v616, %v617
      %v619 = vrot.slane %v618, 2
      %v620 = vadd.f32 %v618, %v619
      %v621 = vrot.slane %v620, 1
      %v622 = vadd.f32 %v620, %v621
      %v623 = vmul.f32 %v614, %v444
      %v624 = vmul.f32 %v622, %v444
      %v625 = vsub.f32 %v597, %v623
      %v626 = vsub.f32 %v599, %v624
      %v627 = vsub.f32 %v603, %v623
      %v628 = vsub.f32 %v605, %v624
      %v629 = vmul.f32 %v625, %v625
      %v630 = vmul.f32 %v626, %v626
      %v631 = vmul.f32 %v627, %v627
      %v632 = vmul.f32 %v628, %v628
      %v633 = vsel %vm346, %v631, 0.0
      %v634 = vadd.f32 %v629, %v633
      %v635 = vrot.slane %v634, 4
      %v636 = vadd.f32 %v634, %v635
      %v637 = vrot.slane %v636, 2
      %v638 = vadd.f32 %v636, %v637
      %v639 = vrot.slane %v638, 1
      %v640 = vadd.f32 %v638, %v639
      %v641 = vsel %vm346, %v632, 0.0
      %v642 = vadd.f32 %v630, %v641
      %v643 = vrot.slane %v642, 4
      %v644 = vadd.f32 %v642, %v643
      %v645 = vrot.slane %v644, 2
      %v646 = vadd.f32 %v644, %v645
      %v647 = vrot.slane %v646, 1
      %v648 = vadd.f32 %v646, %v647
      %v649 = vmul.f32 %v640, %v444
      %v650 = vmul.f32 %v648, %v444
      %v651 = vadd.f32 %v649, 1e-05
      %v652 = vadd.f32 %v650, 1e-05
      %v653 = vrsqrt.pop %v651
      %v654 = vrsqrt.pop %v652
      %v655 = vmul.f32 %v625, %v653
      %v656 = vmul.f32 %v626, %v654
      %v657 = vmul.f32 %v627, %v653
      %v658 = vmul.f32 %v628, %v654
      %659 = vset.pattern.permute.xlu0 4
      %660 = vperm.xlu0 %659, %v324
      %v661 = vpop.permute.xlu0 %660
      %663 = vset.pattern.permute.xlu0 4
      %664 = vperm.xlu0 %663, %v325
      %v665 = vpop.permute.xlu0 %664
      %v667 = vmul.f32 %v655, %v661
      %v668 = vmul.f32 %v656, %v661
      %v669 = vmul.f32 %v657, %v665
      %v670 = vmul.f32 %v658, %v665
      %671 = vset.pattern.permute.xlu0 5
      %672 = vperm.xlu0 %671, %v324
      %v673 = vpop.permute.xlu0 %672
      %675 = vset.pattern.permute.xlu0 5
      %676 = vperm.xlu0 %675, %v325
      %v677 = vpop.permute.xlu0 %676
      %v679 = vadd.f32 %v667, %v673
      %v680 = vadd.f32 %v668, %v673
      %v681 = vadd.f32 %v669, %v677
      %v682 = vadd.f32 %v670, %v677
      %v683 = vmax.f32 %v679, 0.0
      %v684 = vmax.f32 %v680, 0.0
      %v685 = vmax.f32 %v681, 0.0
      %v686 = vmax.f32 %v682, 0.0
      %688 = vset.pattern.permute.xlu0 0
      %689 = vperm.xlu0 %688, %v326
      %v690 = vpop.permute.xlu0 %689
      %v693 = vsel %vm517, %v323, 0
      %v696 = vsel %vm346, %v685, 0
      %v699 = vsel %vm346, %v686, 0
      %701 = vmatprep.subr.mxu0 0.0
      %702 = vmatpush1.msra.mxu0 0.0
      %703 = vmatprep.subr.mxu0 0.0
      %704 = vmatpush1.msra.mxu0 0.0
      %705 = vmatprep.subr.mxu0 0.0
      %706 = vmatpush1.msra.mxu0 0.0
      %707 = vmatprep.subr.mxu0 0.0
      %708 = vmatpush1.msra.mxu0 0.0
      %709 = vmatprep.subr.mxu0 0.0
      %710 = vmatpush1.msra.mxu0 0.0
      %711 = vmatprep.subr.mxu0 0.0
      %712 = vmatpush1.msra.mxu0 0.0
      %713 = vmatprep.subr.mxu0 0.0
      %714 = vmatpush1.msra.mxu0 0.0
      %715 = vmatprep.subr.mxu0 0.0
      %716 = vmatpush1.msra.mxu0 0.0
      %717 = vmatprep.subr.mxu0 0.0
      %718 = vmatpush1.msra.mxu0 0.0
      %719 = vmatprep.subr.mxu0 0.0
      %720 = vmatpush1.msra.mxu0 0.0
      %721 = vmatprep.subr.mxu0 0.0
      %722 = vmatpush1.msra.mxu0 0.0
      %723 = vmatprep.subr.mxu0 0.0
      %724 = vmatpush1.msra.mxu0 0.0
      %725 = vmatprep.subr.mxu0 0.0
      %726 = vmatpush1.msra.mxu0 0.0
      %727 = vmatprep.subr.mxu0 0.0
      %728 = vmatpush1.msra.mxu0 0.0
      %729 = vmatprep.subr.mxu0 %v699
      %730 = vmatpush1.msra.mxu0 %v696
      %731 = vmatprep.subr.mxu0 %v684
      %732 = vmatpush1.msra.mxu0 %v683
      %733 = vmatprep.subr.mxu0 0.0
      %734 = vmatpush2.msra.mxu0 0.0
      %735 = vmatprep.subr.mxu0 0.0
      %736 = vmatpush2.msra.mxu0 0.0
      %737 = vmatprep.subr.mxu0 0.0
      %738 = vmatpush2.msra.mxu0 0.0
      %739 = vmatprep.subr.mxu0 0.0
      %740 = vmatpush2.msra.mxu0 0.0
      %741 = vmatprep.subr.mxu0 0.0
      %742 = vmatpush2.msra.mxu0 0.0
      %743 = vmatprep.subr.mxu0 0.0
      %744 = vmatpush2.msra.mxu0 0.0
      %745 = vmatprep.subr.mxu0 0.0
      %746 = vmatpush2.msra.mxu0 0.0
      %747 = vmatprep.subr.mxu0 0.0
      %748 = vmatpush2.msra.mxu0 0.0
      %749 = vmatprep.subr.mxu0 0.0
      %750 = vmatpush2.msra.mxu0 0.0
      %751 = vmatprep.subr.mxu0 0.0
      %752 = vmatpush2.msra.mxu0 0.0
      %753 = vmatprep.subr.mxu0 0.0
      %754 = vmatpush2.msra.mxu0 0.0
      %755 = vmatprep.subr.mxu0 0.0
      %756 = vmatpush2.msra.mxu0 0.0
      %757 = vmatprep.subr.mxu0 0.0
      %758 = vmatpush2.msra.mxu0 0.0
      %759 = vmatprep.subr.mxu0 0.0
      %760 = vmatpush2.msra.mxu0 0.0
      %761 = vmatprep.subr.mxu0 0.0
      %762 = vmatpush2.msra.mxu0 0.0
      %763 = vmatprep.subr.mxu0 0.0
      %764 = vmatpush2.msra.mxu0 0.0
      %765 = vmatprep.mubr.f32.mxu0 0.0
      %766 = vmatmul.mubr.f32.gmra.mxu0 %v693
      %v767 = vpop.f32.mrf.mxu0
      %v768 = vadd.f32 %v690, %v767
      %v769 = vpop.f32.mrf.mxu0
      %v770 = vadd.f32 %v690, %v769
      %771 = vdwg.mxu0
      %v772 = vsel %vm346, %v768, 0.0
      %v773 = vrot.slane %v772, 4
      %v774 = vadd.f32 %v772, %v773
      %v775 = vrot.slane %v774, 2
      %v776 = vadd.f32 %v774, %v775
      %v777 = vrot.slane %v776, 1
      %v778 = vadd.f32 %v776, %v777
      %v779 = vsel %vm346, %v770, 0.0
      %v780 = vrot.slane %v779, 4
      %v781 = vadd.f32 %v779, %v780
      %v782 = vrot.slane %v781, 2
      %v783 = vadd.f32 %v781, %v782
      %v784 = vrot.slane %v783, 1
      %v785 = vadd.f32 %v783, %v784
      %v786 = vrcp.pop 4.0
      %v787 = vmul.f32 %v778, %v786
      %v788 = vmul.f32 %v785, %v786
      %v789 = vsub.f32 %v768, %v787
      %v790 = vsub.f32 %v770, %v788
      %v791 = vmul.f32 %v789, %v789
      %v792 = vmul.f32 %v790, %v790
      %v793 = vsel %vm346, %v791, 0.0
      %v794 = vrot.slane %v793, 4
      %v795 = vadd.f32 %v793, %v794
      %v796 = vrot.slane %v795, 2
      %v797 = vadd.f32 %v795, %v796
      %v798 = vrot.slane %v797, 1
      %v799 = vadd.f32 %v797, %v798
      %v800 = vsel %vm346, %v792, 0.0
      %v801 = vrot.slane %v800, 4
      %v802 = vadd.f32 %v800, %v801
      %v803 = vrot.slane %v802, 2
      %v804 = vadd.f32 %v802, %v803
      %v805 = vrot.slane %v804, 1
      %v806 = vadd.f32 %v804, %v805
      %v807 = vmul.f32 %v799, %v786
      %v808 = vmul.f32 %v806, %v786
      %v809 = vadd.f32 %v807, 1e-05
      %v810 = vadd.f32 %v808, 1e-05
      %v811 = vrsqrt.pop %v809
      %v812 = vrsqrt.pop %v810
      %v813 = vmul.f32 %v789, %v811
      %v814 = vmul.f32 %v790, %v812
      %815 = vset.pattern.permute.xlu0 1
      %816 = vperm.xlu0 %815, %v326
      %v817 = vpop.permute.xlu0 %816
      %v819 = vmul.f32 %v813, %v817
      %v820 = vmul.f32 %v814, %v817
      %821 = vset.pattern.permute.xlu0 2
      %822 = vperm.xlu0 %821, %v326
      %v823 = vpop.permute.xlu0 %822
      %v825 = vadd.f32 %v819, %v823
      %v826 = vadd.f32 %v820, %v823
      %v827 = vmax.f32 %v825, 0.0
      %v828 = vmax.f32 %v826, 0.0
      %v829 = vld [vmem:[%s6] sm:$0xf]
      %831 = vset.pattern.permute.xlu0 0
      %832 = vperm.xlu0 %831, %v829
      %v833 = vpop.permute.xlu0 %832
      %v835 = vmul.f32 %v827, %v833
      %v836 = vmul.f32 %v828, %v833
      %837 = vset.pattern.permute.xlu0 1
      %838 = vperm.xlu0 %837, %v829
      %v839 = vpop.permute.xlu0 %838
      %v841 = vadd.f32 %v835, %v839
      %v842 = vadd.f32 %v836, %v839
      %v843 = vmax.f32 %v841, 0.0
      %v844 = vmax.f32 %v842, 0.0
      %v847 = vcombine.low %v843, %v844
      %849 = vst [vmem:[%s316] sm:$0xff] %v847
      %s850 = smul.u32 2, %s23
      %p851 = scmp.lt.s32.totalorder %s22, 1
      %s852 = scalar_select %p851, %s22, 1
      %p853 = scmp.lt.s32.totalorder %s850, 1
      %s854 = scalar_select %p853, %s850, 1
      %s855 = smul.addr %s852, 2
      %s856 = sadd.s32 %s854, %s855
      %s857 = smul.addr %s856, 4
      %s858 = scalar_lea.vmem %s7, %s857
      // Predicated region
      $region49: #{fc_forward.3} parent=47 // pred_check
        %p859 = pneg %p204
      $region50: #{fc_forward.3} parent=47 // pred_check_branch
        %861 = sbr.rel (%p859) target = $region52
      $region51: #{fc_forward.3} parent=47 // pred_region
        %s862 = smul.u32 2, %s23
      $region52: #{fc_forward.3} parent=47 // pred_fallthru
        _
    $region48: #{fc_forward.3} parent=5 // pred_fallthru
      _
    %p863 = scmp.le.s32.totalorder 2, %s13
    // Predicated region
    $region53: #{fc_forward.3} parent=5 // pred_check
      %p864 = pneg %p863
    $region54: #{fc_forward.3} parent=5 // pred_check_branch
      %866 = sbr.rel (%p864) target = $region56
    $region55: #{fc_forward.3} parent=5 // pred_region
      %s867 = ssub.s32 %s13, 2
      // Predicated region
      $region57: #{fc_forward.3} parent=55 // pred_check
        %p868 = pneg %p210
      $region58: #{fc_forward.3} parent=55 // pred_check_branch
        %870 = sbr.rel (%p868) target = $region60
      $region59: #{fc_forward.3} parent=55 // pred_region
        %s871 = smul.u32 2, %s25
        %p872 = scmp.lt.s32.totalorder %s24, 1
        %s873 = scalar_select %p872, %s24, 1
        %p874 = scmp.lt.s32.totalorder %s871, 1
        %s875 = scalar_select %p874, %s871, 1
        %s876 = smul.addr %s873, 2
        %s877 = sadd.s32 %s875, %s876
        %s878 = smul.addr %s877, 4
        %s879 = scalar_lea.vmem %s7, %s878
      $region60: #{fc_forward.3} parent=55 // pred_fallthru
        _
    $region56: #{fc_forward.3} parent=5 // pred_fallthru
      _
  $region6: #{fc_forward.3} parent=0 // loop_footer
    %s17 = sadd.s32 1, %s13
  $region7: #{fc_forward.3} parent=0 // loop_footer_branch
    %12 = sbr.rel target = $region3
  $region8: #{fc_forward.3} parent=0 // loop_exit
    _

// kernel: fc_forward.2
$region0: #{fc_forward.2}
  #allocation0 [shape = 'u32[]', space=smem, size = 0x4, offset = 0x4, fixed_abs, tag = 'smem constant byte address 0x4 - core index']
  #allocation1 [shape = 'u32[144,128]{1,0:T(1,128)}', space=vmem, size = 0x12000, scoped, tag = 'internal scratch']
  %s0 = inlined_call_operand.vmem [shape: f32[2,4,256], index: 0, kind: input, shape index: {}]
  %s1 = inlined_call_operand.vmem [shape: f32[12,4], index: 1, kind: input, shape index: {}]
  %s2 = inlined_call_operand.vmem [shape: f32[12,12], index: 2, kind: input, shape index: {}]
  %s3 = inlined_call_operand.vmem [shape: f32[4,12], index: 3, kind: input, shape index: {}]
  %s4 = inlined_call_operand.vmem [shape: f32[12,6], index: 4, kind: input, shape index: {}]
  %s5 = inlined_call_operand.vmem [shape: f32[4,3], index: 5, kind: input, shape index: {}]
  %s6 = inlined_call_operand.vmem [shape: f32[2,1,2,4,1], index: 6, kind: output, shape index: {}]
  %s7 = sld [smem:[#allocation0]]
  $region57: #{fc_forward.2} parent=0
    _
  %s9 = ssub.s32 1, %s7
  %s10 = scalar_select 0, %s9, %s7
  loop: start=0, step=1, limit=4
  $region2: #{fc_forward.2} parent=0 // loop_pre_header
    _
  $region3: #{fc_forward.2} parent=0 // loop_header
    %s12 = sphi 0, %s16
    %p13 = scmp.ge.s32.totalorder %s12, 4
    %s19 = sphi 0, %s31
    %s20 = sphi 0, %s27
    %s21 = sphi 0, %s19
    %s22 = sphi 0, %s20
    %s23 = sphi 0, %s21
    %s24 = sphi 0, %s22
    %s36 = sphi 0, %s38
    %s39 = sphi 0, %s36
    %s40 = sphi 0, %s39
    %s56 = sphi 0, %s40
    %s60 = sphi 0, %s60
    %s62 = sphi 0, %s60
    %s63 = sphi 0, %s62
    %s77 = sphi 0, %s63
    %s81 = sphi 0, %s81
    %s83 = sphi 0, %s81
    %s84 = sphi 0, %s83
    %s98 = sphi 0, %s84
    %s102 = sphi 0, %s102
    %s104 = sphi 0, %s102
    %s105 = sphi 0, %s104
    %s119 = sphi 0, %s105
    %s123 = sphi 0, %s123
    %s125 = sphi 0, %s123
    %s126 = sphi 0, %s125
    %s140 = sphi 0, %s126
    %s144 = sphi 0, %s144
    %s146 = sphi 0, %s144
    %s147 = sphi 0, %s146
    %s161 = sphi 0, %s147
    %s169 = sphi 0, %s171
    %s172 = sphi 0, %s169
    %s173 = sphi 0, %s172
    %s189 = sphi 0, %s173
  $region4: #{fc_forward.2} parent=0 // loop_header_branch
    %15 = sbr.rel (%p13) target = $region8
  $region5: #{fc_forward.2} parent=0 // loop_body
    %s17 = ssub.s32 %s12, 1
    %s18 = ssub.s32 %s12, 2
    %s25 = sadd.s32 1, %s20
    %p26 = scmp.ge.s32.totalorder %s25, 1
    %s27 = scalar_select %p26, 0, %s25
    %s28 = sadd.s32 1, %s19
    %s29 = scalar_select %p26, %s28, %s19
    %p30 = scmp.ge.s32.totalorder %s29, 2
    %s31 = scalar_select %p30, 0, %s29
    %s32 = ssub.s32 %s19, %s31
    %s33 = ssub.s32 %s20, %s27
    %s34 = sor.u32 %s32, %s33
    %p35 = scmp.eq.s32.totalorder %s34, 0
    %s37 = sadd.s32 %s36, 1
    %s38 = scalar_select %p35, %s36, %s37
    %p41 = pneg %p35
    %p42 = scmp.eq.s32.totalorder %s12, 1
    %p43 = por %p41, %p42
    %p44 = scmp.ne.s32.totalorder %s36, %s39
    %p45 = scmp.eq.s32.totalorder %s12, 0
    %p46 = por %p44, %p45
    %p47 = scmp.ne.s32.totalorder %s36, %s39
    %p48 = scmp.eq.s32.totalorder %s17, 1
    %p49 = por %p47, %p48
    %p50 = scmp.ne.s32.totalorder %s39, %s40
    %p51 = scmp.eq.s32.totalorder %s17, 0
    %p52 = por %p50, %p51
    %p53 = scmp.ne.s32.totalorder %s39, %s40
    %p54 = scmp.eq.s32.totalorder %s18, 1
    %p55 = por %p53, %p54
    %p57 = scmp.ne.s32.totalorder %s40, %s56
    %p58 = scmp.eq.s32.totalorder %s18, 0
    %p59 = por %p57, %p58
    %s61 = sadd.s32 %s60, 1
    %p64 = scmp.eq.s32.totalorder %s12, 1
    %p65 = scmp.ne.s32.totalorder %s60, %s62
    %p66 = scmp.eq.s32.totalorder %s12, 0
    %p67 = por %p65, %p66
    %p68 = scmp.ne.s32.totalorder %s60, %s62
    %p69 = scmp.eq.s32.totalorder %s17, 1
    %p70 = por %p68, %p69
    %p71 = scmp.ne.s32.totalorder %s62, %s63
    %p72 = scmp.eq.s32.totalorder %s17, 0
    %p73 = por %p71, %p72
    %p74 = scmp.ne.s32.totalorder %s62, %s63
    %p75 = scmp.eq.s32.totalorder %s18, 1
    %p76 = por %p74, %p75
    %p78 = scmp.ne.s32.totalorder %s63, %s77
    %p79 = scmp.eq.s32.totalorder %s18, 0
    %p80 = por %p78, %p79
    %s82 = sadd.s32 %s81, 1
    %p85 = scmp.eq.s32.totalorder %s12, 1
    %p86 = scmp.ne.s32.totalorder %s81, %s83
    %p87 = scmp.eq.s32.totalorder %s12, 0
    %p88 = por %p86, %p87
    %p89 = scmp.ne.s32.totalorder %s81, %s83
    %p90 = scmp.eq.s32.totalorder %s17, 1
    %p91 = por %p89, %p90
    %p92 = scmp.ne.s32.totalorder %s83, %s84
    %p93 = scmp.eq.s32.totalorder %s17, 0
    %p94 = por %p92, %p93
    %p95 = scmp.ne.s32.totalorder %s83, %s84
    %p96 = scmp.eq.s32.totalorder %s18, 1
    %p97 = por %p95, %p96
    %p99 = scmp.ne.s32.totalorder %s84, %s98
    %p100 = scmp.eq.s32.totalorder %s18, 0
    %p101 = por %p99, %p100
    %s103 = sadd.s32 %s102, 1
    %p106 = scmp.eq.s32.totalorder %s12, 1
    %p107 = scmp.ne.s32.totalorder %s102, %s104
    %p108 = scmp.eq.s32.totalorder %s12, 0
    %p109 = por %p107, %p108
    %p110 = scmp.ne.s32.totalorder %s102, %s104
    %p111 = scmp.eq.s32.totalorder %s17, 1
    %p112 = por %p110, %p111
    %p113 = scmp.ne.s32.totalorder %s104, %s105
    %p114 = scmp.eq.s32.totalorder %s17, 0
    %p115 = por %p113, %p114
    %p116 = scmp.ne.s32.totalorder %s104, %s105
    %p117 = scmp.eq.s32.totalorder %s18, 1
    %p118 = por %p116, %p117
    %p120 = scmp.ne.s32.totalorder %s105, %s119
    %p121 = scmp.eq.s32.totalorder %s18, 0
    %p122 = por %p120, %p121
    %s124 = sadd.s32 %s123, 1
    %p127 = scmp.eq.s32.totalorder %s12, 1
    %p128 = scmp.ne.s32.totalorder %s123, %s125
    %p129 = scmp.eq.s32.totalorder %s12, 0
    %p130 = por %p128, %p129
    %p131 = scmp.ne.s32.totalorder %s123, %s125
    %p132 = scmp.eq.s32.totalorder %s17, 1
    %p133 = por %p131, %p132
    %p134 = scmp.ne.s32.totalorder %s125, %s126
    %p135 = scmp.eq.s32.totalorder %s17, 0
    %p136 = por %p134, %p135
    %p137 = scmp.ne.s32.totalorder %s125, %s126
    %p138 = scmp.eq.s32.totalorder %s18, 1
    %p139 = por %p137, %p138
    %p141 = scmp.ne.s32.totalorder %s126, %s140
    %p142 = scmp.eq.s32.totalorder %s18, 0
    %p143 = por %p141, %p142
    %s145 = sadd.s32 %s144, 1
    %p148 = scmp.eq.s32.totalorder %s12, 1
    %p149 = scmp.ne.s32.totalorder %s144, %s146
    %p150 = scmp.eq.s32.totalorder %s12, 0
    %p151 = por %p149, %p150
    %p152 = scmp.ne.s32.totalorder %s144, %s146
    %p153 = scmp.eq.s32.totalorder %s17, 1
    %p154 = por %p152, %p153
    %p155 = scmp.ne.s32.totalorder %s146, %s147
    %p156 = scmp.eq.s32.totalorder %s17, 0
    %p157 = por %p155, %p156
    %p158 = scmp.ne.s32.totalorder %s146, %s147
    %p159 = scmp.eq.s32.totalorder %s18, 1
    %p160 = por %p158, %p159
    %p162 = scmp.ne.s32.totalorder %s147, %s161
    %p163 = scmp.eq.s32.totalorder %s18, 0
    %p164 = por %p162, %p163
    %s165 = ssub.s32 %s19, %s31
    %s166 = ssub.s32 %s20, %s27
    %s167 = sor.u32 %s165, %s166
    %p168 = scmp.eq.s32.totalorder %s167, 0
    %s170 = sadd.s32 %s169, 1
    %s171 = scalar_select %p168, %s169, %s170
    %p174 = pneg %p168
    %p175 = scmp.eq.s32.totalorder %s12, 1
    %p176 = por %p174, %p175
    %p177 = scmp.ne.s32.totalorder %s169, %s172
    %p178 = scmp.eq.s32.totalorder %s12, 0
    %p179 = por %p177, %p178
    %p180 = scmp.ne.s32.totalorder %s169, %s172
    %p181 = scmp.eq.s32.totalorder %s17, 1
    %p182 = por %p180, %p181
    %p183 = scmp.ne.s32.totalorder %s172, %s173
    %p184 = scmp.eq.s32.totalorder %s17, 0
    %p185 = por %p183, %p184
    %p186 = scmp.ne.s32.totalorder %s172, %s173
    %p187 = scmp.eq.s32.totalorder %s18, 1
    %p188 = por %p186, %p187
    %p190 = scmp.ne.s32.totalorder %s173, %s189
    %p191 = scmp.eq.s32.totalorder %s18, 0
    %p192 = por %p190, %p191
    %p193 = scmp.le.s32.totalorder 1, %s12
    %p194 = scmp.lt.s32.totalorder %s12, 3
    %p195 = pnand %p193, %p194
    %p196 = pneg %p195
    // Predicated region
    $region9: #{fc_forward.2} parent=5 // pred_check
      _
    $region10: #{fc_forward.2} parent=5 // pred_check_branch
      %198 = sbr.rel (%p195) target = $region12
    $region11: #{fc_forward.2} parent=5 // pred_region
      %s199 = ssub.s32 %s12, 1
      // Predicated region
      $region13: #{fc_forward.2} parent=11 // pred_check
        %p200 = pneg %p73
      $region14: #{fc_forward.2} parent=11 // pred_check_branch
        %202 = sbr.rel (%p200) target = $region16
      $region15: #{fc_forward.2} parent=11 // pred_region
        _
      $region16: #{fc_forward.2} parent=11 // pred_fallthru
        _
      // Predicated region
      $region17: #{fc_forward.2} parent=11 // pred_check
        %p203 = pneg %p94
      $region18: #{fc_forward.2} parent=11 // pred_check_branch
        %205 = sbr.rel (%p203) target = $region20
      $region19: #{fc_forward.2} parent=11 // pred_region
        _
      $region20: #{fc_forward.2} parent=11 // pred_fallthru
        _
      // Predicated region
      $region21: #{fc_forward.2} parent=11 // pred_check
        %p206 = pneg %p115
      $region22: #{fc_forward.2} parent=11 // pred_check_branch
        %208 = sbr.rel (%p206) target = $region24
      $region23: #{fc_forward.2} parent=11 // pred_region
        _
      $region24: #{fc_forward.2} parent=11 // pred_fallthru
        _
      // Predicated region
      $region25: #{fc_forward.2} parent=11 // pred_check
        %p209 = pneg %p136
      $region26: #{fc_forward.2} parent=11 // pred_check_branch
        %211 = sbr.rel (%p209) target = $region28
      $region27: #{fc_forward.2} parent=11 // pred_region
        _
      $region28: #{fc_forward.2} parent=11 // pred_fallthru
        _
      // Predicated region
      $region29: #{fc_forward.2} parent=11 // pred_check
        %p212 = pneg %p157
      $region30: #{fc_forward.2} parent=11 // pred_check_branch
        %214 = sbr.rel (%p212) target = $region32
      $region31: #{fc_forward.2} parent=11 // pred_region
        _
      $region32: #{fc_forward.2} parent=11 // pred_fallthru
        _
    $region12: #{fc_forward.2} parent=5 // pred_fallthru
      _
    %p215 = scmp.lt.s32.totalorder %s12, 2
    // Predicated region
    $region33: #{fc_forward.2} parent=5 // pred_check
      %p216 = pneg %p215
    $region34: #{fc_forward.2} parent=5 // pred_check_branch
      %218 = sbr.rel (%p216) target = $region36
    $region35: #{fc_forward.2} parent=5 // pred_region
      // Predicated region
      $region37: #{fc_forward.2} parent=35 // pred_check
        %p219 = pneg %p46
      $region38: #{fc_forward.2} parent=35 // pred_check_branch
        %221 = sbr.rel (%p219) target = $region40
      $region39: #{fc_forward.2} parent=35 // pred_region
        %s222 = smul.u32 2, %s20
        %p223 = scmp.lt.s32.totalorder %s19, 1
        %s224 = scalar_select %p223, %s19, 1
        %p225 = scmp.lt.s32.totalorder %s222, 1
        %s226 = scalar_select %p225, %s222, 1
        %s227 = smul.addr %s224, 2
        %s228 = sadd.s32 %s226, %s227
        %s229 = smul.addr %s228, 4
        %s230 = scalar_lea.vmem %s0, %s229
        %s231 = smul.u32 2, %s20
      $region40: #{fc_forward.2} parent=35 // pred_fallthru
        _
    $region36: #{fc_forward.2} parent=5 // pred_fallthru
      _
    %p232 = scmp.le.s32.totalorder 1, %s12
    %p233 = scmp.lt.s32.totalorder %s12, 3
    %p234 = pnand %p232, %p233
    %p235 = pneg %p234
    // Predicated region
    $region41: #{fc_forward.2} parent=5 // pred_check
      _
    $region42: #{fc_forward.2} parent=5 // pred_check_branch
      %237 = sbr.rel (%p234) target = $region44
    $region43: #{fc_forward.2} parent=5 // pred_region
      %s238 = ssub.s32 %s12, 1
      %s239 = smul.u32 2, %s22
      %p240 = scmp.lt.s32.totalorder %s21, 1
      %s241 = scalar_select %p240, %s21, 1
      %p242 = scmp.lt.s32.totalorder %s239, 1
      %s243 = scalar_select %p242, %s239, 1
      %s244 = smul.addr %s241, 2
      %s245 = sadd.s32 %s243, %s244
      %s246 = smul.addr %s245, 4
      %s247 = scalar_lea.vmem %s0, %s246
      %p248 = pneg %p52
      %p249 = pneg %p49
      %p250 = pneg %p73
      %p251 = pneg %p70
      %p252 = pneg %p94
      %p253 = pneg %p91
      %p254 = pneg %p115
      %p255 = pneg %p112
      %p256 = pneg %p136
      %p257 = pneg %p133
      %p258 = pneg %p157
      %p259 = pneg %p154
      %p260 = pneg %p185
      %p261 = pneg %p182
      %p262 = scmp.lt.s32.totalorder %s21, 1
      %s263 = scalar_select %p262, %s21, 1
      %p264 = scmp.lt.s32.totalorder %s22, 0
      %s265 = scalar_select %p264, %s22, 0
      %s266 = smul.addr %s265, 2
      %s267 = smul.addr %s263, 2
      %s268 = sadd.s32 %s266, %s267
      %s269 = smul.addr %s268, 4
      %s270 = scalar_lea.vmem %s6, %s269
      %s271 = smul.u32 2, %s22
      %p272 = scmp.lt.s32.totalorder %s21, 1
      %s273 = scalar_select %p272, %s21, 1
      %p274 = scmp.lt.s32.totalorder %s271, 1
      %s275 = scalar_select %p274, %s271, 1
      %s276 = smul.addr %s273, 2
      %s277 = sadd.s32 %s275, %s276
      %s278 = smul.addr %s277, 4
      %s279 = scalar_lea.vmem %s0, %s278
      %s280 = smul.u32 2, %s22
      %p281 = scmp.lt.s32.totalorder %s21, 1
      %s282 = scalar_select %p281, %s21, 1
      %p283 = scmp.lt.s32.totalorder %s22, 0
      %s284 = scalar_select %p283, %s22, 0
      %s285 = smul.addr %s284, 2
      %s286 = smul.addr %s282, 2
      %s287 = sadd.s32 %s285, %s286
      %s288 = smul.addr %s287, 4
      %s289 = scalar_lea.vmem %s6, %s288
      %v290 = vld [vmem:[%s279] sm:$0xff]
      %v291 = vld [vmem:[%s1] sm:$0xff]
      %v292 = vld [vmem:[%s1 + $0x8] sm:$0xf]
      %v293 = vld [vmem:[%s2] sm:$0xff]
      %v294 = vld [vmem:[%s2 + $0x8] sm:$0xf]
      %v295 = vld [vmem:[%s3] sm:$0xf]
      %v296 = vld [vmem:[%s4] sm:$0xff]
      %v297 = vld [vmem:[%s4 + $0x8] sm:$0xf]
      %v298 = vld [vmem:[%s5] sm:$0xf]
      %300 = vset.pattern.permute.xlu0 0
      %301 = vperm.xlu0 %300, %v296
      %v302 = vpop.permute.xlu0 %301
      %305 = vset.pattern.permute.xlu0 0
      %306 = vperm.xlu0 %305, %v297
      %v307 = vpop.permute.xlu0 %306
      %v310 = vcombine.high %v290, %v290
      %vm311 = vcmask 31744
      %v313 = vsel %vm311, %v291, 0
      %v316 = vsel %vm311, %v292, 0
      %vm318 = vcmask 1043456
      %v319 = vsel %vm318, %v290, 0
      %v321 = vsel %vm318, %v310, 0
      %323 = vmatprep.subr.mxu0 0.0
      %324 = vmatpush1.msra.mxu0 0.0
      %325 = vmatprep.subr.mxu0 0.0
      %326 = vmatpush1.msra.mxu0 0.0
      %327 = vmatprep.subr.mxu0 0.0
      %328 = vmatpush1.msra.mxu0 0.0
      %329 = vmatprep.subr.mxu0 0.0
      %330 = vmatpush1.msra.mxu0 0.0
      %331 = vmatprep.subr.mxu0 0.0
      %332 = vmatpush1.msra.mxu0 0.0
      %333 = vmatprep.subr.mxu0 0.0
      %334 = vmatpush1.msra.mxu0 0.0
      %335 = vmatprep.subr.mxu0 0.0
      %336 = vmatpush1.msra.mxu0 0.0
      %337 = vmatprep.subr.mxu0 0.0
      %338 = vmatpush1.msra.mxu0 0.0
      %339 = vmatprep.subr.mxu0 0.0
      %340 = vmatpush1.msra.mxu0 0.0
      %341 = vmatprep.subr.mxu0 0.0
      %342 = vmatpush1.msra.mxu0 0.0
      %343 = vmatprep.subr.mxu0 0.0
      %344 = vmatpush1.msra.mxu0 0.0
      %345 = vmatprep.subr.mxu0 0.0
      %346 = vmatpush1.msra.mxu0 0.0
      %347 = vmatprep.subr.mxu0 0.0
      %348 = vmatpush1.msra.mxu0 0.0
      %349 = vmatprep.subr.mxu0 0.0
      %350 = vmatpush1.msra.mxu0 0.0
      %351 = vmatprep.subr.mxu0 0.0
      %352 = vmatpush1.msra.mxu0 0.0
      %353 = vmatprep.subr.mxu0 %v321
      %354 = vmatpush1.msra.mxu0 %v319
      %355 = vmatprep.subr.mxu0 0.0
      %356 = vmatpush2.msra.mxu0 0.0
      %357 = vmatprep.subr.mxu0 0.0
      %358 = vmatpush2.msra.mxu0 0.0
      %359 = vmatprep.subr.mxu0 0.0
      %360 = vmatpush2.msra.mxu0 0.0
      %361 = vmatprep.subr.mxu0 0.0
      %362 = vmatpush2.msra.mxu0 0.0
      %363 = vmatprep.subr.mxu0 0.0
      %364 = vmatpush2.msra.mxu0 0.0
      %365 = vmatprep.subr.mxu0 0.0
      %366 = vmatpush2.msra.mxu0 0.0
      %367 = vmatprep.subr.mxu0 0.0
      %368 = vmatpush2.msra.mxu0 0.0
      %369 = vmatprep.subr.mxu0 0.0
      %370 = vmatpush2.msra.mxu0 0.0
      %371 = vmatprep.subr.mxu0 0.0
      %372 = vmatpush2.msra.mxu0 0.0
      %373 = vmatprep.subr.mxu0 0.0
      %374 = vmatpush2.msra.mxu0 0.0
      %375 = vmatprep.subr.mxu0 0.0
      %376 = vmatpush2.msra.mxu0 0.0
      %377 = vmatprep.subr.mxu0 0.0
      %378 = vmatpush2.msra.mxu0 0.0
      %379 = vmatprep.subr.mxu0 0.0
      %380 = vmatpush2.msra.mxu0 0.0
      %381 = vmatprep.subr.mxu0 0.0
      %382 = vmatpush2.msra.mxu0 0.0
      %383 = vmatprep.subr.mxu0 0.0
      %384 = vmatpush2.msra.mxu0 0.0
      %385 = vmatprep.subr.mxu0 0.0
      %386 = vmatpush2.msra.mxu0 0.0
      %387 = vmatprep.mubr.f32.mxu0 0.0
      %388 = vmatmul.mubr.f32.gmra.mxu0 %v313
      %v389 = vpop.f32.mrf.mxu0
      %v390 = vadd.f32 %v302, %v389
      %v391 = vpop.f32.mrf.mxu0
      %v392 = vadd.f32 %v302, %v391
      %393 = vmatprep.mubr.f32.mxu0 0.0
      %394 = vmatmul.mubr.f32.gmra.mxu0 %v316
      %v395 = vpop.f32.mrf.mxu0
      %v396 = vadd.f32 %v307, %v395
      %v397 = vpop.f32.mrf.mxu0
      %v398 = vadd.f32 %v307, %v397
      %399 = vdwg.mxu0
      %v400 = vsel %vm318, %v396, 0.0
      %v401 = vadd.f32 %v390, %v400
      %v402 = vrot.slane %v401, 4
      %v403 = vadd.f32 %v401, %v402
      %v404 = vrot.slane %v403, 2
      %v405 = vadd.f32 %v403, %v404
      %v406 = vrot.slane %v405, 1
      %v407 = vadd.f32 %v405, %v406
      %v408 = vsel %vm318, %v398, 0.0
      %v409 = vadd.f32 %v392, %v408
      %v410 = vrot.slane %v409, 4
      %v411 = vadd.f32 %v409, %v410
      %v412 = vrot.slane %v411, 2
      %v413 = vadd.f32 %v411, %v412
      %v414 = vrot.slane %v413, 1
      %v415 = vadd.f32 %v413, %v414
      %v416 = vrcp.pop 12.0
      %v417 = vmul.f32 %v407, %v416
      %v418 = vmul.f32 %v415, %v416
      %v419 = vsub.f32 %v390, %v417
      %v420 = vsub.f32 %v392, %v418
      %v421 = vsub.f32 %v396, %v417
      %v422 = vsub.f32 %v398, %v418
      %v423 = vmul.f32 %v419, %v419
      %v424 = vmul.f32 %v420, %v420
      %v425 = vmul.f32 %v421, %v421
      %v426 = vmul.f32 %v422, %v422
      %v427 = vsel %vm318, %v425, 0.0
      %v428 = vadd.f32 %v423, %v427
      %v429 = vrot.slane %v428, 4
      %v430 = vadd.f32 %v428, %v429
      %v431 = vrot.slane %v430, 2
      %v432 = vadd.f32 %v430, %v431
      %v433 = vrot.slane %v432, 1
      %v434 = vadd.f32 %v432, %v433
      %v435 = vsel %vm318, %v426, 0.0
      %v436 = vadd.f32 %v424, %v435
      %v437 = vrot.slane %v436, 4
      %v438 = vadd.f32 %v436, %v437
      %v439 = vrot.slane %v438, 2
      %v440 = vadd.f32 %v438, %v439
      %v441 = vrot.slane %v440, 1
      %v442 = vadd.f32 %v440, %v441
      %v443 = vmul.f32 %v434, %v416
      %v444 = vmul.f32 %v442, %v416
      %v445 = vadd.f32 %v443, 1e-05
      %v446 = vadd.f32 %v444, 1e-05
      %v447 = vrsqrt.pop %v445
      %v448 = vrsqrt.pop %v446
      %v449 = vmul.f32 %v419, %v447
      %v450 = vmul.f32 %v420, %v448
      %v451 = vmul.f32 %v421, %v447
      %v452 = vmul.f32 %v422, %v448
      %453 = vset.pattern.permute.xlu0 1
      %454 = vperm.xlu0 %453, %v296
      %v455 = vpop.permute.xlu0 %454
      %457 = vset.pattern.permute.xlu0 1
      %458 = vperm.xlu0 %457, %v297
      %v459 = vpop.permute.xlu0 %458
      %v461 = vmul.f32 %v449, %v455
      %v462 = vmul.f32 %v450, %v455
      %v463 = vmul.f32 %v451, %v459
      %v464 = vmul.f32 %v452, %v459
      %465 = vset.pattern.permute.xlu0 2
      %466 = vperm.xlu0 %465, %v296
      %v467 = vpop.permute.xlu0 %466
      %469 = vset.pattern.permute.xlu0 2
      %470 = vperm.xlu0 %469, %v297
      %v471 = vpop.permute.xlu0 %470
      %v473 = vadd.f32 %v461, %v467
      %v474 = vadd.f32 %v462, %v467
      %v475 = vadd.f32 %v463, %v471
      %v476 = vadd.f32 %v464, %v471
      %v477 = vmax.f32 %v473, 0.0
      %v478 = vmax.f32 %v474, 0.0
      %v479 = vmax.f32 %v475, 0.0
      %v480 = vmax.f32 %v476, 0.0
      %481 = vset.pattern.permute.xlu0 3
      %482 = vperm.xlu0 %481, %v296
      %v483 = vpop.permute.xlu0 %482
      %485 = vset.pattern.permute.xlu0 3
      %486 = vperm.xlu0 %485, %v297
      %v487 = vpop.permute.xlu0 %486
      %vm489 = vcmask 97280
      %v491 = vsel %vm489, %v293, 0
      %v494 = vsel %vm489, %v294, 0
      %v497 = vsel %vm318, %v479, 0
      %v500 = vsel %vm318, %v480, 0
      %502 = vmatprep.subr.mxu0 0.0
      %503 = vmatpush1.msra.mxu0 0.0
      %504 = vmatprep.subr.mxu0 0.0
      %505 = vmatpush1.msra.mxu0 0.0
      %506 = vmatprep.subr.mxu0 0.0
      %507 = vmatpush1.msra.mxu0 0.0
      %508 = vmatprep.subr.mxu0 0.0
      %509 = vmatpush1.msra.mxu0 0.0
      %510 = vmatprep.subr.mxu0 0.0
      %511 = vmatpush1.msra.mxu0 0.0
      %512 = vmatprep.subr.mxu0 0.0
      %513 = vmatpush1.msra.mxu0 0.0
      %514 = vmatprep.subr.mxu0 0.0
      %515 = vmatpush1.msra.mxu0 0.0
      %516 = vmatprep.subr.mxu0 0.0
      %517 = vmatpush1.msra.mxu0 0.0
      %518 = vmatprep.subr.mxu0 0.0
      %519 = vmatpush1.msra.mxu0 0.0
      %520 = vmatprep.subr.mxu0 0.0
      %521 = vmatpush1.msra.mxu0 0.0
      %522 = vmatprep.subr.mxu0 0.0
      %523 = vmatpush1.msra.mxu0 0.0
      %524 = vmatprep.subr.mxu0 0.0
      %525 = vmatpush1.msra.mxu0 0.0
      %526 = vmatprep.subr.mxu0 0.0
      %527 = vmatpush1.msra.mxu0 0.0
      %528 = vmatprep.subr.mxu0 0.0
      %529 = vmatpush1.msra.mxu0 0.0
      %530 = vmatprep.subr.mxu0 %v500
      %531 = vmatpush1.msra.mxu0 %v497
      %532 = vmatprep.subr.mxu0 %v478
      %533 = vmatpush1.msra.mxu0 %v477
      %534 = vmatprep.subr.mxu0 0.0
      %535 = vmatpush2.msra.mxu0 0.0
      %536 = vmatprep.subr.mxu0 0.0
      %537 = vmatpush2.msra.mxu0 0.0
      %538 = vmatprep.subr.mxu0 0.0
      %539 = vmatpush2.msra.mxu0 0.0
      %540 = vmatprep.subr.mxu0 0.0
      %541 = vmatpush2.msra.mxu0 0.0
      %542 = vmatprep.subr.mxu0 0.0
      %543 = vmatpush2.msra.mxu0 0.0
      %544 = vmatprep.subr.mxu0 0.0
      %545 = vmatpush2.msra.mxu0 0.0
      %546 = vmatprep.subr.mxu0 0.0
      %547 = vmatpush2.msra.mxu0 0.0
      %548 = vmatprep.subr.mxu0 0.0
      %549 = vmatpush2.msra.mxu0 0.0
      %550 = vmatprep.subr.mxu0 0.0
      %551 = vmatpush2.msra.mxu0 0.0
      %552 = vmatprep.subr.mxu0 0.0
      %553 = vmatpush2.msra.mxu0 0.0
      %554 = vmatprep.subr.mxu0 0.0
      %555 = vmatpush2.msra.mxu0 0.0
      %556 = vmatprep.subr.mxu0 0.0
      %557 = vmatpush2.msra.mxu0 0.0
      %558 = vmatprep.subr.mxu0 0.0
      %559 = vmatpush2.msra.mxu0 0.0
      %560 = vmatprep.subr.mxu0 0.0
      %561 = vmatpush2.msra.mxu0 0.0
      %562 = vmatprep.subr.mxu0 0.0
      %563 = vmatpush2.msra.mxu0 0.0
      %564 = vmatprep.subr.mxu0 0.0
      %565 = vmatpush2.msra.mxu0 0.0
      %566 = vmatprep.mubr.f32.mxu0 0.0
      %567 = vmatmul.mubr.f32.gmra.mxu0 %v491
      %v568 = vpop.f32.mrf.mxu0
      %v569 = vadd.f32 %v483, %v568
      %v570 = vpop.f32.mrf.mxu0
      %v571 = vadd.f32 %v483, %v570
      %572 = vmatprep.mubr.f32.mxu0 0.0
      %573 = vmatmul.mubr.f32.gmra.mxu0 %v494
      %v574 = vpop.f32.mrf.mxu0
      %v575 = vadd.f32 %v487, %v574
      %v576 = vpop.f32.mrf.mxu0
      %v577 = vadd.f32 %v487, %v576
      %578 = vdwg.mxu0
      %v579 = vsel %vm318, %v575, 0.0
      %v580 = vadd.f32 %v569, %v579
      %v581 = vrot.slane %v580, 4
      %v582 = vadd.f32 %v580, %v581
      %v583 = vrot.slane %v582, 2
      %v584 = vadd.f32 %v582, %v583
      %v585 = vrot.slane %v584, 1
      %v586 = vadd.f32 %v584, %v585
      %v587 = vsel %vm318, %v577, 0.0
      %v588 = vadd.f32 %v571, %v587
      %v589 = vrot.slane %v588, 4
      %v590 = vadd.f32 %v588, %v589
      %v591 = vrot.slane %v590, 2
      %v592 = vadd.f32 %v590, %v591
      %v593 = vrot.slane %v592, 1
      %v594 = vadd.f32 %v592, %v593
      %v595 = vmul.f32 %v586, %v416
      %v596 = vmul.f32 %v594, %v416
      %v597 = vsub.f32 %v569, %v595
      %v598 = vsub.f32 %v571, %v596
      %v599 = vsub.f32 %v575, %v595
      %v600 = vsub.f32 %v577, %v596
      %v601 = vmul.f32 %v597, %v597
      %v602 = vmul.f32 %v598, %v598
      %v603 = vmul.f32 %v599, %v599
      %v604 = vmul.f32 %v600, %v600
      %v605 = vsel %vm318, %v603, 0.0
      %v606 = vadd.f32 %v601, %v605
      %v607 = vrot.slane %v606, 4
      %v608 = vadd.f32 %v606, %v607
      %v609 = vrot.slane %v608, 2
      %v610 = vadd.f32 %v608, %v609
      %v611 = vrot.slane %v610, 1
      %v612 = vadd.f32 %v610, %v611
      %v613 = vsel %vm318, %v604, 0.0
      %v614 = vadd.f32 %v602, %v613
      %v615 = vrot.slane %v614, 4
      %v616 = vadd.f32 %v614, %v615
      %v617 = vrot.slane %v616, 2
      %v618 = vadd.f32 %v616, %v617
      %v619 = vrot.slane %v618, 1
      %v620 = vadd.f32 %v618, %v619
      %v621 = vmul.f32 %v612, %v416
      %v622 = vmul.f32 %v620, %v416
      %v623 = vadd.f32 %v621, 1e-05
      %v624 = vadd.f32 %v622, 1e-05
      %v625 = vrsqrt.pop %v623
      %v626 = vrsqrt.pop %v624
      %v627 = vmul.f32 %v597, %v625
      %v628 = vmul.f32 %v598, %v626
      %v629 = vmul.f32 %v599, %v625
      %v630 = vmul.f32 %v600, %v626
      %631 = vset.pattern.permute.xlu0 4
      %632 = vperm.xlu0 %631, %v296
      %v633 = vpop.permute.xlu0 %632
      %635 = vset.pattern.permute.xlu0 4
      %636 = vperm.xlu0 %635, %v297
      %v637 = vpop.permute.xlu0 %636
      %v639 = vmul.f32 %v627, %v633
      %v640 = vmul.f32 %v628, %v633
      %v641 = vmul.f32 %v629, %v637
      %v642 = vmul.f32 %v630, %v637
      %643 = vset.pattern.permute.xlu0 5
      %644 = vperm.xlu0 %643, %v296
      %v645 = vpop.permute.xlu0 %644
      %647 = vset.pattern.permute.xlu0 5
      %648 = vperm.xlu0 %647, %v297
      %v649 = vpop.permute.xlu0 %648
      %v651 = vadd.f32 %v639, %v645
      %v652 = vadd.f32 %v640, %v645
      %v653 = vadd.f32 %v641, %v649
      %v654 = vadd.f32 %v642, %v649
      %v655 = vmax.f32 %v651, 0.0
      %v656 = vmax.f32 %v652, 0.0
      %v657 = vmax.f32 %v653, 0.0
      %v658 = vmax.f32 %v654, 0.0
      %660 = vset.pattern.permute.xlu0 0
      %661 = vperm.xlu0 %660, %v298
      %v662 = vpop.permute.xlu0 %661
      %v665 = vsel %vm489, %v295, 0
      %v668 = vsel %vm318, %v657, 0
      %v671 = vsel %vm318, %v658, 0
      %673 = vmatprep.subr.mxu0 0.0
      %674 = vmatpush1.msra.mxu0 0.0
      %675 = vmatprep.subr.mxu0 0.0
      %676 = vmatpush1.msra.mxu0 0.0
      %677 = vmatprep.subr.mxu0 0.0
      %678 = vmatpush1.msra.mxu0 0.0
      %679 = vmatprep.subr.mxu0 0.0
      %680 = vmatpush1.msra.mxu0 0.0
      %681 = vmatprep.subr.mxu0 0.0
      %682 = vmatpush1.msra.mxu0 0.0
      %683 = vmatprep.subr.mxu0 0.0
      %684 = vmatpush1.msra.mxu0 0.0
      %685 = vmatprep.subr.mxu0 0.0
      %686 = vmatpush1.msra.mxu0 0.0
      %687 = vmatprep.subr.mxu0 0.0
      %688 = vmatpush1.msra.mxu0 0.0
      %689 = vmatprep.subr.mxu0 0.0
      %690 = vmatpush1.msra.mxu0 0.0
      %691 = vmatprep.subr.mxu0 0.0
      %692 = vmatpush1.msra.mxu0 0.0
      %693 = vmatprep.subr.mxu0 0.0
      %694 = vmatpush1.msra.mxu0 0.0
      %695 = vmatprep.subr.mxu0 0.0
      %696 = vmatpush1.msra.mxu0 0.0
      %697 = vmatprep.subr.mxu0 0.0
      %698 = vmatpush1.msra.mxu0 0.0
      %699 = vmatprep.subr.mxu0 0.0
      %700 = vmatpush1.msra.mxu0 0.0
      %701 = vmatprep.subr.mxu0 %v671
      %702 = vmatpush1.msra.mxu0 %v668
      %703 = vmatprep.subr.mxu0 %v656
      %704 = vmatpush1.msra.mxu0 %v655
      %705 = vmatprep.subr.mxu0 0.0
      %706 = vmatpush2.msra.mxu0 0.0
      %707 = vmatprep.subr.mxu0 0.0
      %708 = vmatpush2.msra.mxu0 0.0
      %709 = vmatprep.subr.mxu0 0.0
      %710 = vmatpush2.msra.mxu0 0.0
      %711 = vmatprep.subr.mxu0 0.0
      %712 = vmatpush2.msra.mxu0 0.0
      %713 = vmatprep.subr.mxu0 0.0
      %714 = vmatpush2.msra.mxu0 0.0
      %715 = vmatprep.subr.mxu0 0.0
      %716 = vmatpush2.msra.mxu0 0.0
      %717 = vmatprep.subr.mxu0 0.0
      %718 = vmatpush2.msra.mxu0 0.0
      %719 = vmatprep.subr.mxu0 0.0
      %720 = vmatpush2.msra.mxu0 0.0
      %721 = vmatprep.subr.mxu0 0.0
      %722 = vmatpush2.msra.mxu0 0.0
      %723 = vmatprep.subr.mxu0 0.0
      %724 = vmatpush2.msra.mxu0 0.0
      %725 = vmatprep.subr.mxu0 0.0
      %726 = vmatpush2.msra.mxu0 0.0
      %727 = vmatprep.subr.mxu0 0.0
      %728 = vmatpush2.msra.mxu0 0.0
      %729 = vmatprep.subr.mxu0 0.0
      %730 = vmatpush2.msra.mxu0 0.0
      %731 = vmatprep.subr.mxu0 0.0
      %732 = vmatpush2.msra.mxu0 0.0
      %733 = vmatprep.subr.mxu0 0.0
      %734 = vmatpush2.msra.mxu0 0.0
      %735 = vmatprep.subr.mxu0 0.0
      %736 = vmatpush2.msra.mxu0 0.0
      %737 = vmatprep.mubr.f32.mxu0 0.0
      %738 = vmatmul.mubr.f32.gmra.mxu0 %v665
      %v739 = vpop.f32.mrf.mxu0
      %v740 = vadd.f32 %v662, %v739
      %v741 = vpop.f32.mrf.mxu0
      %v742 = vadd.f32 %v662, %v741
      %743 = vdwg.mxu0
      %v744 = vsel %vm318, %v740, 0.0
      %v745 = vrot.slane %v744, 4
      %v746 = vadd.f32 %v744, %v745
      %v747 = vrot.slane %v746, 2
      %v748 = vadd.f32 %v746, %v747
      %v749 = vrot.slane %v748, 1
      %v750 = vadd.f32 %v748, %v749
      %v751 = vsel %vm318, %v742, 0.0
      %v752 = vrot.slane %v751, 4
      %v753 = vadd.f32 %v751, %v752
      %v754 = vrot.slane %v753, 2
      %v755 = vadd.f32 %v753, %v754
      %v756 = vrot.slane %v755, 1
      %v757 = vadd.f32 %v755, %v756
      %v758 = vrcp.pop 4.0
      %v759 = vmul.f32 %v750, %v758
      %v760 = vmul.f32 %v757, %v758
      %v761 = vsub.f32 %v740, %v759
      %v762 = vsub.f32 %v742, %v760
      %v763 = vmul.f32 %v761, %v761
      %v764 = vmul.f32 %v762, %v762
      %v765 = vsel %vm318, %v763, 0.0
      %v766 = vrot.slane %v765, 4
      %v767 = vadd.f32 %v765, %v766
      %v768 = vrot.slane %v767, 2
      %v769 = vadd.f32 %v767, %v768
      %v770 = vrot.slane %v769, 1
      %v771 = vadd.f32 %v769, %v770
      %v772 = vsel %vm318, %v764, 0.0
      %v773 = vrot.slane %v772, 4
      %v774 = vadd.f32 %v772, %v773
      %v775 = vrot.slane %v774, 2
      %v776 = vadd.f32 %v774, %v775
      %v777 = vrot.slane %v776, 1
      %v778 = vadd.f32 %v776, %v777
      %v779 = vmul.f32 %v771, %v758
      %v780 = vmul.f32 %v778, %v758
      %v781 = vadd.f32 %v779, 1e-05
      %v782 = vadd.f32 %v780, 1e-05
      %v783 = vrsqrt.pop %v781
      %v784 = vrsqrt.pop %v782
      %v785 = vmul.f32 %v761, %v783
      %v786 = vmul.f32 %v762, %v784
      %787 = vset.pattern.permute.xlu0 1
      %788 = vperm.xlu0 %787, %v298
      %v789 = vpop.permute.xlu0 %788
      %v791 = vmul.f32 %v785, %v789
      %v792 = vmul.f32 %v786, %v789
      %793 = vset.pattern.permute.xlu0 2
      %794 = vperm.xlu0 %793, %v298
      %v795 = vpop.permute.xlu0 %794
      %v797 = vadd.f32 %v791, %v795
      %v798 = vadd.f32 %v792, %v795
      %v799 = vmax.f32 %v797, 0.0
      %v800 = vmax.f32 %v798, 0.0
      %v801 = vsel %vm318, %v799, 0.0
      %v802 = vsel %vm318, %v800, 0.0
      %v803 = vadd.f32 %v801, %v802
      %804 = vadd.xlane.f32.xlu0 %v803
      %v805 = vpop.xlane.xlu0 %804
      %vm806 = vcmask 3072
      %807 = vst.msk [vmem:[%s289] sm:$0xf] %vm806, %v805
      %v808 = vmul.f32 %v799, %v799
      %v809 = vmul.f32 %v800, %v800
      %v810 = vsel %vm318, %v808, 0.0
      %v811 = vsel %vm318, %v809, 0.0
      %v812 = vadd.f32 %v810, %v811
      %813 = vadd.xlane.f32.xlu0 %v812
      %v814 = vpop.xlane.xlu0 %813
      %s815 = scalar_lea.vmem %s289, 4
      %816 = vst.msk [vmem:[%s815] sm:$0xf] %vm806, %v814
      %p817 = scmp.lt.s32.totalorder %s21, 1
      %s818 = scalar_select %p817, %s21, 1
      %p819 = scmp.lt.s32.totalorder %s22, 0
      %s820 = scalar_select %p819, %s22, 0
      %s821 = smul.addr %s820, 2
      %s822 = smul.addr %s818, 2
      %s823 = sadd.s32 %s821, %s822
      %s824 = smul.addr %s823, 4
      %s825 = scalar_lea.vmem %s6, %s824
      // Predicated region
      $region45: #{fc_forward.2} parent=43 // pred_check
        %p826 = pneg %p182
      $region46: #{fc_forward.2} parent=43 // pred_check_branch
        %828 = sbr.rel (%p826) target = $region48
      $region47: #{fc_forward.2} parent=43 // pred_region
        _
      $region48: #{fc_forward.2} parent=43 // pred_fallthru
        _
    $region44: #{fc_forward.2} parent=5 // pred_fallthru
      _
    %p829 = scmp.le.s32.totalorder 2, %s12
    // Predicated region
    $region49: #{fc_forward.2} parent=5 // pred_check
      %p830 = pneg %p829
    $region50: #{fc_forward.2} parent=5 // pred_check_branch
      %832 = sbr.rel (%p830) target = $region52
    $region51: #{fc_forward.2} parent=5 // pred_region
      %s833 = ssub.s32 %s12, 2
      // Predicated region
      $region53: #{fc_forward.2} parent=51 // pred_check
        %p834 = pneg %p188
      $region54: #{fc_forward.2} parent=51 // pred_check_branch
        %836 = sbr.rel (%p834) target = $region56
      $region55: #{fc_forward.2} parent=51 // pred_region
        %p837 = scmp.lt.s32.totalorder %s23, 1
        %s838 = scalar_select %p837, %s23, 1
        %p839 = scmp.lt.s32.totalorder %s24, 0
        %s840 = scalar_select %p839, %s24, 0
        %s841 = smul.addr %s840, 2
        %s842 = smul.addr %s838, 2
        %s843 = sadd.s32 %s841, %s842
        %s844 = smul.addr %s843, 4
        %s845 = scalar_lea.vmem %s6, %s844
      $region56: #{fc_forward.2} parent=51 // pred_fallthru
        _
    $region52: #{fc_forward.2} parent=5 // pred_fallthru
      _
  $region6: #{fc_forward.2} parent=0 // loop_footer
    %s16 = sadd.s32 1, %s12
  $region7: #{fc_forward.2} parent=0 // loop_footer_branch
    %11 = sbr.rel target = $region3
  $region8: #{fc_forward.2} parent=0 // loop_exit
    _

</llo_original>
